<compile_context>
chip_gen: v6e
topology: v6e:2x2x1
jax: 0.10.0
libtpu: 0.0.40
codegen_flags: <defaults>
</compile_context>

<pallas_src>
import functools
import math

import jax
import jax.numpy as jnp
from jax.experimental import pallas as pl
from jax.experimental.pallas import tpu as pltpu


# ------------------------------ tiling helpers ------------------------------

_TM, _TN, _TK = 256, 256, 512   # tile targets (bf16 operands, f32 accumulator)


def _pick_tile(dim, target, align):
    """Largest tile <= target that divides `dim` and is `align`-aligned
    (sublane=8 / lane=128); falls back to the full dim (always legal)."""
    if dim <= target:
        return dim
    t = (target // align) * align
    while t >= align:
        if dim % t == 0:
            return t
        t -= align
    return dim


# ------------------------------ Pallas kernels -------------------------------

def _matmul_bias_kernel(x_ref, w_ref, b_ref, o_ref, acc_ref, *, activation):
    """out = act(x @ w + b), tiled over (M, N, K) with a f32 accumulator."""
    k = pl.program_id(2)

    @pl.when(k == 0)
    def _():
        acc_ref[...] = jnp.zeros_like(acc_ref)

    acc_ref[...] += jnp.dot(x_ref[...], w_ref[...],
                            preferred_element_type=jnp.float32)

    @pl.when(k == pl.num_programs(2) - 1)
    def _():
        y = acc_ref[...] + b_ref[...]          # bias kept in f32
        if activation == "gelu":
            y = jax.nn.gelu(y, approximate=True)
        o_ref[...] = y.astype(o_ref.dtype)


def _matmul_bias_residual_ln_kernel(x_ref, w_ref, b_ref, r_ref, g_ref, bt_ref,
                                    o_ref, acc_ref, *, eps):
    """out = LayerNorm(x @ w + b + residual); full hidden per block (LN axis)."""
    k = pl.program_id(1)

    @pl.when(k == 0)
    def _():
        acc_ref[...] = jnp.zeros_like(acc_ref)

    acc_ref[...] += jnp.dot(x_ref[...], w_ref[...],
                            preferred_element_type=jnp.float32)

    @pl.when(k == pl.num_programs(1) - 1)
    def _():
        y = acc_ref[...] + b_ref[...] + r_ref[...].astype(jnp.float32)
        mean = jnp.mean(y, axis=-1, keepdims=True)
        var = jnp.mean(jnp.square(y - mean), axis=-1, keepdims=True)
        y = (y - mean) * jax.lax.rsqrt(var + eps)
        o_ref[...] = (y * g_ref[...] + bt_ref[...]).astype(o_ref.dtype)


def _layernorm_kernel(x_ref, g_ref, b_ref, o_ref, *, eps):
    x = x_ref[...].astype(jnp.float32)
    mean = jnp.mean(x, axis=-1, keepdims=True)
    var = jnp.mean(jnp.square(x - mean), axis=-1, keepdims=True)
    y = (x - mean) * jax.lax.rsqrt(var + eps)
    o_ref[...] = (y * g_ref[...] + b_ref[...]).astype(o_ref.dtype)


def _attention_kernel(qkv_ref, mask_ref, o_ref, *, num_heads, head_dim, scale):
    """Fused multi-head self-attention for one batch element.

    qkv block: (1, S, 3H) bf16 (q|k|v along the lane axis), mask: (1, 1, S)
    additive f32, out: (1, S, H) bf16.  Heads are unrolled statically so the
    wrapper never materializes a (B*NH, S, Dh) layout in HBM, and the mask is
    never replicated per head.
    """
    hidden = num_heads * head_dim
    qkv = qkv_ref[0]                                   # (S, 3H) bf16
    mask = mask_ref[0]                                 # (1, S) additive, f32
    ctx_heads = []
    for h in range(num_heads):
        lo = h * head_dim
        q = qkv[:, lo:lo + head_dim]                                   # (S, Dh)
        kk = qkv[:, hidden + lo:hidden + lo + head_dim]
        v = qkv[:, 2 * hidden + lo:2 * hidden + lo + head_dim]
        # scores = q @ k^T in f32 on the MXU
        s = jax.lax.dot_general(q, kk, (((1,), (1,)), ((), ())),
                                preferred_element_type=jnp.float32) * scale
        s = s + mask                                                   # (S, S)
        s = s - jnp.max(s, axis=-1, keepdims=True)
        p = jnp.exp(s)
        p = p * pl.reciprocal(jnp.sum(p, axis=-1, keepdims=True), approx=True)
        ctx = jnp.dot(p.astype(v.dtype), v,
                      preferred_element_type=jnp.float32)              # (S, Dh)
        ctx_heads.append(ctx)
    # Single lane-dense store of all heads.
    o_ref[0] = jnp.concatenate(ctx_heads, axis=-1).astype(o_ref.dtype)
    # TODO(synk): for long sequences switch to an online-softmax (flash)
    # formulation with a KV-block grid axis instead of the full (S, S) scores.


def _pooler_classifier_kernel(cls_ref, pw_ref, pb_ref, fw_ref, fb_ref, o_ref):
    """logits = tanh(cls @ pool_w + pool_b) @ fc_w + fc_b (dropout = identity)."""
    pooled = jnp.tanh(jnp.dot(cls_ref[...], pw_ref[...],
                              preferred_element_type=jnp.float32) + pb_ref[...])
    logits = jnp.dot(pooled.astype(fw_ref.dtype), fw_ref[...],
                     preferred_element_type=jnp.float32) + fb_ref[...]
    o_ref[...] = logits


# ------------------------------ Pallas wrappers ------------------------------

_VMEM = pl.BlockSpec(memory_space=pltpu.MemorySpace.VMEM)


def linear_bias(x, w, b, activation="none"):
    """Tiled (M,N,K) matmul with fused bias (+ optional GELU); bf16 output."""
    M, K = x.shape
    N = w.shape[1]
    tm = _pick_tile(M, _TM, 8)
    tn = _pick_tile(N, _TN, 128)
    tk = _pick_tile(K, _TK, 128)
    cost = pl.CostEstimate(
        flops=2 * M * N * K, transcendentals=0,
        bytes_accessed=int(M * K * x.dtype.itemsize + K * N * w.dtype.itemsize
                           + N * 4 + M * N * 2))
    return pl.pallas_call(
        functools.partial(_matmul_bias_kernel, activation=activation),
        out_shape=jax.ShapeDtypeStruct((M, N), jnp.bfloat16),
        grid=(M // tm, N // tn, K // tk),
        in_specs=[
            pl.BlockSpec((tm, tk), lambda i, j, k: (i, k)),
            pl.BlockSpec((tk, tn), lambda i, j, k: (k, j)),
            pl.BlockSpec((1, tn), lambda i, j, k: (0, j)),
        ],
        out_specs=pl.BlockSpec((tm, tn), lambda i, j, k: (i, j)),
        scratch_shapes=[pltpu.VMEM((tm, tn), jnp.float32)],
        compiler_params=pltpu.CompilerParams(
            dimension_semantics=("parallel", "parallel", "arbitrary")),
        cost_estimate=cost,
    )(x, w, b.reshape(1, N))


def linear_bias_residual_ln(x, w, b, residual, gamma, beta, eps=1e-12):
    """out = LayerNorm(x @ w + b + residual); tiled over (M, K), full N."""
    M, K = x.shape
    N = w.shape[1]
    tm = _pick_tile(M, _TM, 8)
    tk = _pick_tile(K, _TK, 128)
    cost = pl.CostEstimate(
        flops=2 * M * N * K, transcendentals=0,
        bytes_accessed=int(M * K * 2 + K * N * 2 + 2 * M * N * 2 + 3 * N * 4))
    return pl.pallas_call(
        functools.partial(_matmul_bias_residual_ln_kernel, eps=eps),
        out_shape=jax.ShapeDtypeStruct((M, N), jnp.bfloat16),
        grid=(M // tm, K // tk),
        in_specs=[
            pl.BlockSpec((tm, tk), lambda i, k: (i, k)),
            pl.BlockSpec((tk, N), lambda i, k: (k, 0)),
            pl.BlockSpec((1, N), lambda i, k: (0, 0)),
            pl.BlockSpec((tm, N), lambda i, k: (i, 0)),
            pl.BlockSpec((1, N), lambda i, k: (0, 0)),
            pl.BlockSpec((1, N), lambda i, k: (0, 0)),
        ],
        out_specs=pl.BlockSpec((tm, N), lambda i, k: (i, 0)),
        scratch_shapes=[pltpu.VMEM((tm, N), jnp.float32)],
        compiler_params=pltpu.CompilerParams(
            dimension_semantics=("parallel", "arbitrary")),
        cost_estimate=cost,
    )(x, w, b.reshape(1, N), residual, gamma, beta)


def layernorm(x, gamma, beta, eps=1e-12):
    M, H = x.shape
    tm = _pick_tile(M, _TM, 8)
    return pl.pallas_call(
        functools.partial(_layernorm_kernel, eps=eps),
        out_shape=jax.ShapeDtypeStruct((M, H), jnp.bfloat16),
        grid=(M // tm,),
        in_specs=[
            pl.BlockSpec((tm, H), lambda i: (i, 0)),
            pl.BlockSpec((1, H), lambda i: (0, 0)),
            pl.BlockSpec((1, H), lambda i: (0, 0)),
        ],
        out_specs=pl.BlockSpec((tm, H), lambda i: (i, 0)),
        compiler_params=pltpu.CompilerParams(dimension_semantics=("parallel",)),
    )(x, gamma, beta)


def multihead_attention(qkv, add_mask, num_heads, head_dim):
    """qkv: (B, S, 3H) bf16; add_mask: (B, 1, S) additive f32 (not replicated)."""
    B, S, three_h = qkv.shape
    H = num_heads * head_dim
    scale = 1.0 / math.sqrt(head_dim)
    return pl.pallas_call(
        functools.partial(_attention_kernel, num_heads=num_heads,
                          head_dim=head_dim, scale=scale),
        out_shape=jax.ShapeDtypeStruct((B, S, H), jnp.bfloat16),
        grid=(B,),
        in_specs=[
            pl.BlockSpec((1, S, three_h), lambda b: (b, 0, 0)),
            pl.BlockSpec((1, 1, S), lambda b: (b, 0, 0)),
        ],
        out_specs=pl.BlockSpec((1, S, H), lambda b: (b, 0, 0)),
        compiler_params=pltpu.CompilerParams(dimension_semantics=("parallel",)),
    )(qkv, add_mask)


def pooler_classifier(cls, pool_w, pool_b, fc_w_pad, fc_b_pad):
    B, H = cls.shape
    n_pad = fc_w_pad.shape[1]
    return pl.pallas_call(
        _pooler_classifier_kernel,
        out_shape=jax.ShapeDtypeStruct((B, n_pad), jnp.float32),
        in_specs=[_VMEM] * 5,
        out_specs=_VMEM,
    )(cls, pool_w, pool_b.reshape(1, H), fc_w_pad, fc_b_pad.reshape(1, n_pad))


# ------------------------------ model definition -----------------------------

def init_params(key, cfg):
    H, I, C = cfg["hidden"], cfg["inter"], cfg["num_classes"]
    c_pad = max(128, ((C + 127) // 128) * 128)   # lane-dense classifier head
    keys = iter(jax.random.split(key, 16 + 16 * cfg["layers"]))

    def w(shape, dtype=jnp.bfloat16, std=0.02):
        return (jax.random.normal(next(keys), shape, jnp.float32) * std).astype(dtype)

    def zeros(*shape):
        return jnp.zeros(shape, jnp.float32)

    def ones(*shape):
        return jnp.ones(shape, jnp.float32)

    fc_w = w((H, C), dtype=jnp.float32)
    fc_w_pad = jnp.zeros((H, c_pad), jnp.float32).at[:, :C].set(fc_w)

    params = {
        "word_emb": w((cfg["vocab"], H), dtype=jnp.float32),
        "pos_emb": w((cfg["max_pos"], H), dtype=jnp.float32),
        "type_emb": w((cfg["types"], H), dtype=jnp.float32),
        "emb_ln_g": ones(1, H),
        "emb_ln_b": zeros(1, H),
        "layers": [],
        "pool_w": w((H, H)),
        "pool_b": zeros(H),
        "fc_w_pad": fc_w_pad.astype(jnp.bfloat16),
        "fc_b_pad": zeros(c_pad),
    }
    for _ in range(cfg["layers"]):
        params["layers"].append({
            # Q/K/V fused into a single (H, 3H) projection.
            "w_qkv": w((H, 3 * H)), "b_qkv": zeros(3 * H),
            "wo": w((H, H)), "bo": zeros(H),
            "ln1_g": ones(1, H), "ln1_b": zeros(1, H),
            "wi": w((H, I)), "bi": zeros(I),
            "wo2": w((I, H)), "bo2": zeros(H),
            "ln2_g": ones(1, H), "ln2_b": zeros(1, H),
        })
    return params


def bert_classifier_forward(params, input_ids, attention_mask, cfg):
    B, S = input_ids.shape
    H = cfg["hidden"]
    NH = cfg["heads"]
    assert H % NH == 0
    Dh = H // NH

    # --- embeddings (gathers are XLA glue; LN is a Pallas kernel) ---
    # TODO(synk): only token_type 0 embeddings (single-segment inputs).
    emb = (params["word_emb"][input_ids]
           + params["pos_emb"][:S][None, :, :]
           + params["type_emb"][0][None, None, :])            # (B, S, H) f32
    h2d = layernorm(emb.reshape(B * S, H),
                    params["emb_ln_g"], params["emb_ln_b"])   # (B*S, H) bf16

    # --- additive attention mask, (B, 1, S): never replicated per head ---
    add_mask = (1.0 - attention_mask.astype(jnp.float32))[:, None, :] * -1e9

    # --- transformer encoder stack (5 pallas_calls per layer) ---
    for lp in params["layers"]:
        qkv = linear_bias(h2d, lp["w_qkv"], lp["b_qkv"])             # (B*S, 3H)
        ctx = multihead_attention(qkv.reshape(B, S, 3 * H), add_mask, NH, Dh)
        h2d = linear_bias_residual_ln(ctx.reshape(B * S, H), lp["wo"], lp["bo"],
                                      h2d, lp["ln1_g"], lp["ln1_b"])
        inter = linear_bias(h2d, lp["wi"], lp["bi"], activation="gelu")
        h2d = linear_bias_residual_ln(inter, lp["wo2"], lp["bo2"],
                                      h2d, lp["ln2_g"], lp["ln2_b"])

    # --- pooler (dense + tanh on [CLS]) + dropout(identity) + classifier ---
    cls = h2d.reshape(B, S, H)[:, 0, :]                        # (B, H) bf16
    logits_pad = pooler_classifier(cls, params["pool_w"], params["pool_b"],
                                   params["fc_w_pad"], params["fc_b_pad"])
    return logits_pad[:, :cfg["num_classes"]]


# ----------------------------------- main ------------------------------------

if __name__ == "__main__":
    cfg = dict(vocab=100, hidden=32, layers=2, heads=2, inter=64,
               max_pos=16, types=2, num_classes=3)

    key = jax.random.PRNGKey(0)
    pkey, ikey = jax.random.split(key)
    params = init_params(pkey, cfg)

    B, S = 2, 8
    input_ids = jax.random.randint(ikey, (B, S), 0, cfg["vocab"], dtype=jnp.int32)
    attention_mask = jnp.array([[1, 1, 1, 1, 1, 1, 1, 1],
                                [1, 1, 1, 1, 1, 0, 0, 0]], dtype=jnp.float32)

    # One jit so all pallas_calls compile into a single program.
    fwd = jax.jit(functools.partial(bert_classifier_forward, cfg=cfg))
    logits = fwd(params, input_ids, attention_mask)
    jax.block_until_ready(logits)

    assert logits.shape == (B, cfg["num_classes"])
    assert bool(jnp.all(jnp.isfinite(logits)))
    print("KERNEL_OK")
</pallas_src>

<mosaic_0001>
module attributes {stable_mosaic.version = 11 : i64} {
  func.func @_matmul_bias_kernel(%arg0: i32, %arg1: i32, %arg2: i32, %arg3: memref<16x32xbf16, #tpu.memory_space<vmem>>, %arg4: memref<32x96xbf16, #tpu.memory_space<vmem>>, %arg5: memref<1x96xf32, #tpu.memory_space<vmem>>, %arg6: memref<16x96xbf16, #tpu.memory_space<vmem>>, %arg7: memref<16x96xf32, #tpu.memory_space<vmem>>) attributes {dimension_semantics = [#tpu.dimension_semantics<parallel>, #tpu.dimension_semantics<parallel>, #tpu.dimension_semantics<arbitrary>], iteration_bounds = array<i64: 1, 1, 1>, scalar_prefetch = 0 : i64, scratch_operands = 1 : i64, tpu.core_type = #tpu.core_type<tc>, window_params = [{transform_indices = @transform_0, window_bounds = array<i64: 16, 32>}, {transform_indices = @transform_1, window_bounds = array<i64: 32, 96>}, {transform_indices = @transform_2, window_bounds = array<i64: 1, 96>}, {transform_indices = @transform_3, window_bounds = array<i64: 16, 96>}]} {
    %c0_i32 = arith.constant 0 : i32
    %0 = arith.cmpi eq, %arg2, %c0_i32 : i32
    %1 = arith.extui %0 : i1 to i32
    %c0_i32_0 = arith.constant 0 : i32
    %2 = arith.cmpi ne, %1, %c0_i32_0 : i32
    scf.if %2 {
      %cst_10 = arith.constant 0.000000e+00 : f32
      %12 = vector.broadcast %cst_10 : f32 to vector<16x96xf32>
      %c0_11 = arith.constant 0 : index
      %c0_12 = arith.constant 0 : index
      %13 = vector.load %arg7[%c0_11, %c0_12] : memref<16x96xf32, #tpu.memory_space<vmem>>, vector<16x96xf32>
      tpu.vector_store %arg7[%c0_11, %c0_12], %12 {strides = array<i32>} : memref<16x96xf32, #tpu.memory_space<vmem>>, vector<16x96xf32>,
    } else {
    }
    %c0 = arith.constant 0 : index
    %c0_1 = arith.constant 0 : index
    %3 = vector.load %arg7[%c0, %c0_1] : memref<16x96xf32, #tpu.memory_space<vmem>>, vector<16x96xf32>
    %c0_2 = arith.constant 0 : index
    %c0_3 = arith.constant 0 : index
    %4 = vector.load %arg3[%c0_2, %c0_3] : memref<16x32xbf16, #tpu.memory_space<vmem>>, vector<16x32xbf16>
    %c0_4 = arith.constant 0 : index
    %c0_5 = arith.constant 0 : index
    %5 = vector.load %arg4[%c0_4, %c0_5] : memref<32x96xbf16, #tpu.memory_space<vmem>>, vector<32x96xbf16>
    %cst = arith.constant dense<0.000000e+00> : vector<16x96xf32>
    %6 = tpu.matmul %4, %5, %cst {dimension_numbers = #tpu.dot_dimension_numbers<[1], [0], [0], [1], [0, 0, 1, 1], [], []>} : vector<16x32xbf16>, vector<32x96xbf16>, vector<16x96xf32> -> vector<16x96xf32>
    %7 = arith.addf %3, %6 : vector<16x96xf32>
    %c0_6 = arith.constant 0 : index
    %c0_7 = arith.constant 0 : index
    %8 = vector.load %arg7[%c0_6, %c0_7] : memref<16x96xf32, #tpu.memory_space<vmem>>, vector<16x96xf32>
    tpu.vector_store %arg7[%c0_6, %c0_7], %7 {strides = array<i32>} : memref<16x96xf32, #tpu.memory_space<vmem>>, vector<16x96xf32>,
    %c0_i32_8 = arith.constant 0 : i32
    %9 = arith.cmpi eq, %arg2, %c0_i32_8 : i32
    %10 = arith.extui %9 : i1 to i32
    %c0_i32_9 = arith.constant 0 : i32
    %11 = arith.cmpi ne, %10, %c0_i32_9 : i32
    scf.if %11 {
      %c0_10 = arith.constant 0 : index
      %c0_11 = arith.constant 0 : index
      %12 = vector.load %arg7[%c0_10, %c0_11] : memref<16x96xf32, #tpu.memory_space<vmem>>, vector<16x96xf32>
      %c0_12 = arith.constant 0 : index
      %c0_13 = arith.constant 0 : index
      %13 = vector.load %arg5[%c0_12, %c0_13] : memref<1x96xf32, #tpu.memory_space<vmem>>, vector<1x96xf32>
      %14 = vector.broadcast %13 : vector<1x96xf32> to vector<16x96xf32>
      %15 = arith.addf %12, %14 : vector<16x96xf32>
      %16 = arith.truncf %15 : vector<16x96xf32> to vector<16x96xbf16>
      %c0_14 = arith.constant 0 : index
      %c0_15 = arith.constant 0 : index
      %17 = vector.load %arg6[%c0_14, %c0_15] : memref<16x96xbf16, #tpu.memory_space<vmem>>, vector<16x96xbf16>
      tpu.vector_store %arg6[%c0_14, %c0_15], %16 {strides = array<i32>} : memref<16x96xbf16, #tpu.memory_space<vmem>>, vector<16x96xbf16>,
    } else {
    }
    return
  }
  func.func @transform_0(%arg0: i32, %arg1: i32, %arg2: i32) -> (i32, i32) {
    %c0_i32 = arith.constant 0 : i32
    return %arg0, %arg2 : i32, i32
  }
  func.func @transform_1(%arg0: i32, %arg1: i32, %arg2: i32) -> (i32, i32) {
    %c0_i32 = arith.constant 0 : i32
    return %arg2, %arg1 : i32, i32
  }
  func.func @transform_2(%arg0: i32, %arg1: i32, %arg2: i32) -> (i32, i32) {
    %c0_i32 = arith.constant 0 : i32
    %c0_i32_0 = arith.constant 0 : i32
    return %c0_i32, %arg1 : i32, i32
  }
  func.func @transform_3(%arg0: i32, %arg1: i32, %arg2: i32) -> (i32, i32) {
    %c0_i32 = arith.constant 0 : i32
    return %arg0, %arg1 : i32, i32
  }
}

module attributes {stable_mosaic.version = 11 : i64} {
  func.func @_layernorm_kernel(%arg0: i32, %arg1: memref<16x32xf32, #tpu.memory_space<vmem>>, %arg2: memref<1x32xf32, #tpu.memory_space<vmem>>, %arg3: memref<1x32xf32, #tpu.memory_space<vmem>>, %arg4: memref<16x32xbf16, #tpu.memory_space<vmem>>) attributes {dimension_semantics = [#tpu.dimension_semantics<parallel>], iteration_bounds = array<i64: 1>, scalar_prefetch = 0 : i64, scratch_operands = 0 : i64, tpu.core_type = #tpu.core_type<tc>, window_params = [{transform_indices = @transform_0, window_bounds = array<i64: 16, 32>}, {pipeline_mode = #tpu.pipeline_mode<synchronous>, transform_indices = @transform_1, window_bounds = array<i64: 1, 32>}, {pipeline_mode = #tpu.pipeline_mode<synchronous>, transform_indices = @transform_2, window_bounds = array<i64: 1, 32>}, {transform_indices = @transform_3, window_bounds = array<i64: 16, 32>}]} {
    %c0 = arith.constant 0 : index
    %c0_0 = arith.constant 0 : index
    %0 = vector.load %arg1[%c0, %c0_0] : memref<16x32xf32, #tpu.memory_space<vmem>>, vector<16x32xf32>
    %cst = arith.constant dense<0.000000e+00> : vector<16xf32>
    %1 = vector.multi_reduction <add>, %0, %cst [1] : vector<16x32xf32> to vector<16xf32>
    %2 = vector.shape_cast %1 : vector<16xf32> to vector<16x1xf32>
    %cst_1 = arith.constant 3.200000e+01 : f32
    %3 = vector.broadcast %cst_1 : f32 to vector<16x1xf32>
    %4 = arith.divf %2, %3 : vector<16x1xf32>
    %5 = vector.broadcast %4 : vector<16x1xf32> to vector<16x32xf32>
    %6 = arith.subf %0, %5 : vector<16x32xf32>
    %7 = arith.mulf %6, %6 : vector<16x32xf32>
    %cst_2 = arith.constant dense<0.000000e+00> : vector<16xf32>
    %8 = vector.multi_reduction <add>, %7, %cst_2 [1] : vector<16x32xf32> to vector<16xf32>
    %9 = vector.shape_cast %8 : vector<16xf32> to vector<16x1xf32>
    %cst_3 = arith.constant 3.200000e+01 : f32
    %10 = vector.broadcast %cst_3 : f32 to vector<16x1xf32>
    %11 = arith.divf %9, %10 : vector<16x1xf32>
    %12 = vector.broadcast %4 : vector<16x1xf32> to vector<16x32xf32>
    %13 = arith.subf %0, %12 : vector<16x32xf32>
    %cst_4 = arith.constant 9.99999996E-13 : f32
    %14 = vector.broadcast %cst_4 : f32 to vector<16x1xf32>
    %15 = arith.addf %11, %14 : vector<16x1xf32>
    %16 = math.rsqrt %15 : vector<16x1xf32>
    %17 = vector.broadcast %16 : vector<16x1xf32> to vector<16x32xf32>
    %18 = arith.mulf %13, %17 : vector<16x32xf32>
    %c0_5 = arith.constant 0 : index
    %c0_6 = arith.constant 0 : index
    %19 = vector.load %arg2[%c0_5, %c0_6] : memref<1x32xf32, #tpu.memory_space<vmem>>, vector<1x32xf32>
    %20 = vector.broadcast %19 : vector<1x32xf32> to vector<16x32xf32>
    %21 = arith.mulf %18, %20 : vector<16x32xf32>
    %c0_7 = arith.constant 0 : index
    %c0_8 = arith.constant 0 : index
    %22 = vector.load %arg3[%c0_7, %c0_8] : memref<1x32xf32, #tpu.memory_space<vmem>>, vector<1x32xf32>
    %23 = vector.broadcast %22 : vector<1x32xf32> to vector<16x32xf32>
    %24 = arith.addf %21, %23 : vector<16x32xf32>
    %25 = arith.truncf %24 : vector<16x32xf32> to vector<16x32xbf16>
    %c0_9 = arith.constant 0 : index
    %c0_10 = arith.constant 0 : index
    %26 = vector.load %arg4[%c0_9, %c0_10] : memref<16x32xbf16, #tpu.memory_space<vmem>>, vector<16x32xbf16>
    tpu.vector_store %arg4[%c0_9, %c0_10], %25 {strides = array<i32>} : memref<16x32xbf16, #tpu.memory_space<vmem>>, vector<16x32xbf16>,
    return
  }
  func.func @transform_0(%arg0: i32) -> (i32, i32) {
    %c0_i32 = arith.constant 0 : i32
    %c0_i32_0 = arith.constant 0 : i32
    return %arg0, %c0_i32 : i32, i32
  }
  func.func @transform_1(%arg0: i32) -> (i32, i32) {
    %c0_i32 = arith.constant 0 : i32
    %c0_i32_0 = arith.constant 0 : i32
    %c0_i32_1 = arith.constant 0 : i32
    return %c0_i32, %c0_i32_0 : i32, i32
  }
  func.func @transform_2(%arg0: i32) -> (i32, i32) {
    %c0_i32 = arith.constant 0 : i32
    %c0_i32_0 = arith.constant 0 : i32
    %c0_i32_1 = arith.constant 0 : i32
    return %c0_i32, %c0_i32_0 : i32, i32
  }
  func.func @transform_3(%arg0: i32) -> (i32, i32) {
    %c0_i32 = arith.constant 0 : i32
    %c0_i32_0 = arith.constant 0 : i32
    return %arg0, %c0_i32 : i32, i32
  }
}

module attributes {stable_mosaic.version = 11 : i64} {
  func.func @_attention_kernel(%arg0: i32, %arg1: memref<1x8x96xbf16, #tpu.memory_space<vmem>>, %arg2: memref<1x1x8xf32, #tpu.memory_space<vmem>>, %arg3: memref<1x8x32xbf16, #tpu.memory_space<vmem>>) attributes {dimension_semantics = [#tpu.dimension_semantics<parallel>], iteration_bounds = array<i64: 2>, scalar_prefetch = 0 : i64, scratch_operands = 0 : i64, tpu.core_type = #tpu.core_type<tc>, window_params = [{transform_indices = @transform_0, window_bounds = array<i64: 1, 8, 96>}, {transform_indices = @transform_1, window_bounds = array<i64: 1, 1, 8>}, {transform_indices = @transform_2, window_bounds = array<i64: 1, 8, 32>}]} {
    %c0 = arith.constant 0 : index
    %c0_0 = arith.constant 0 : index
    %c0_1 = arith.constant 0 : index
    %0 = vector.load %arg1[%c0, %c0_0, %c0_1] : memref<1x8x96xbf16, #tpu.memory_space<vmem>>, vector<1x8x96xbf16>
    %1 = vector.shape_cast %0 : vector<1x8x96xbf16> to vector<8x96xbf16>
    %c0_2 = arith.constant 0 : index
    %c0_3 = arith.constant 0 : index
    %c0_4 = arith.constant 0 : index
    %2 = vector.load %arg2[%c0_2, %c0_3, %c0_4] : memref<1x1x8xf32, #tpu.memory_space<vmem>>, vector<1x1x8xf32>
    %3 = vector.shape_cast %2 : vector<1x1x8xf32> to vector<1x8xf32>
    %4 = vector.extract_strided_slice %1 {offsets = [0, 0], sizes = [8, 16], strides = [1, 1]} : vector<8x96xbf16> to vector<8x16xbf16>
    %5 = vector.extract_strided_slice %1 {offsets = [0, 32], sizes = [8, 16], strides = [1, 1]} : vector<8x96xbf16> to vector<8x16xbf16>
    %6 = vector.extract_strided_slice %1 {offsets = [0, 64], sizes = [8, 16], strides = [1, 1]} : vector<8x96xbf16> to vector<8x16xbf16>
    %cst = arith.constant dense<0.000000e+00> : vector<8x8xf32>
    %7 = tpu.matmul %4, %5, %cst {dimension_numbers = #tpu.dot_dimension_numbers<[1], [1], [0], [0], [0, 0, 1, 0], [], []>} : vector<8x16xbf16>, vector<8x16xbf16>, vector<8x8xf32> -> vector<8x8xf32>
    %cst_5 = arith.constant 2.500000e-01 : f32
    %8 = vector.broadcast %cst_5 : f32 to vector<8x8xf32>
    %9 = arith.mulf %7, %8 : vector<8x8xf32>
    %10 = vector.broadcast %3 : vector<1x8xf32> to vector<8x8xf32>
    %11 = arith.addf %9, %10 : vector<8x8xf32>
    %cst_6 = arith.constant dense<0xFF800000> : vector<8xf32>
    %12 = vector.multi_reduction <maximumf>, %11, %cst_6 [1] : vector<8x8xf32> to vector<8xf32>
    %13 = vector.shape_cast %12 : vector<8xf32> to vector<8x1xf32>
    %14 = vector.broadcast %13 : vector<8x1xf32> to vector<8x8xf32>
    %15 = arith.subf %11, %14 : vector<8x8xf32>
    %16 = math.exp %15 : vector<8x8xf32>
    %cst_7 = arith.constant dense<0.000000e+00> : vector<8xf32>
    %17 = vector.multi_reduction <add>, %16, %cst_7 [1] : vector<8x8xf32> to vector<8xf32>
    %18 = vector.shape_cast %17 : vector<8xf32> to vector<8x1xf32>
    %19 = tpu.reciprocal %18 {approx = true} : vector<8x1xf32> -> vector<8x1xf32>
    %20 = vector.broadcast %19 : vector<8x1xf32> to vector<8x8xf32>
    %21 = arith.mulf %16, %20 : vector<8x8xf32>
    %22 = arith.truncf %21 : vector<8x8xf32> to vector<8x8xbf16>
    %cst_8 = arith.constant dense<0.000000e+00> : vector<8x16xf32>
    %23 = tpu.matmul %22, %6, %cst_8 {dimension_numbers = #tpu.dot_dimension_numbers<[1], [0], [0], [1], [0, 0, 1, 1], [], []>} : vector<8x8xbf16>, vector<8x16xbf16>, vector<8x16xf32> -> vector<8x16xf32>
    %24 = vector.extract_strided_slice %1 {offsets = [0, 16], sizes = [8, 16], strides = [1, 1]} : vector<8x96xbf16> to vector<8x16xbf16>
    %25 = vector.extract_strided_slice %1 {offsets = [0, 48], sizes = [8, 16], strides = [1, 1]} : vector<8x96xbf16> to vector<8x16xbf16>
    %26 = vector.extract_strided_slice %1 {offsets = [0, 80], sizes = [8, 16], strides = [1, 1]} : vector<8x96xbf16> to vector<8x16xbf16>
    %cst_9 = arith.constant dense<0.000000e+00> : vector<8x8xf32>
    %27 = tpu.matmul %24, %25, %cst_9 {dimension_numbers = #tpu.dot_dimension_numbers<[1], [1], [0], [0], [0, 0, 1, 0], [], []>} : vector<8x16xbf16>, vector<8x16xbf16>, vector<8x8xf32> -> vector<8x8xf32>
    %cst_10 = arith.constant 2.500000e-01 : f32
    %28 = vector.broadcast %cst_10 : f32 to vector<8x8xf32>
    %29 = arith.mulf %27, %28 : vector<8x8xf32>
    %30 = vector.broadcast %3 : vector<1x8xf32> to vector<8x8xf32>
    %31 = arith.addf %29, %30 : vector<8x8xf32>
    %cst_11 = arith.constant dense<0xFF800000> : vector<8xf32>
    %32 = vector.multi_reduction <maximumf>, %31, %cst_11 [1] : vector<8x8xf32> to vector<8xf32>
    %33 = vector.shape_cast %32 : vector<8xf32> to vector<8x1xf32>
    %34 = vector.broadcast %33 : vector<8x1xf32> to vector<8x8xf32>
    %35 = arith.subf %31, %34 : vector<8x8xf32>
    %36 = math.exp %35 : vector<8x8xf32>
    %cst_12 = arith.constant dense<0.000000e+00> : vector<8xf32>
    %37 = vector.multi_reduction <add>, %36, %cst_12 [1] : vector<8x8xf32> to vector<8xf32>
    %38 = vector.shape_cast %37 : vector<8xf32> to vector<8x1xf32>
    %39 = tpu.reciprocal %38 {approx = true} : vector<8x1xf32> -> vector<8x1xf32>
    %40 = vector.broadcast %39 : vector<8x1xf32> to vector<8x8xf32>
    %41 = arith.mulf %36, %40 : vector<8x8xf32>
    %42 = arith.truncf %41 : vector<8x8xf32> to vector<8x8xbf16>
    %cst_13 = arith.constant dense<0.000000e+00> : vector<8x16xf32>
    %43 = tpu.matmul %42, %26, %cst_13 {dimension_numbers = #tpu.dot_dimension_numbers<[1], [0], [0], [1], [0, 0, 1, 1], [], []>} : vector<8x8xbf16>, vector<8x16xbf16>, vector<8x16xf32> -> vector<8x16xf32>
    %44 = tpu.concatenate %23, %43 in 1 : vector<8x16xf32>, vector<8x16xf32> -> vector<8x32xf32>
    %45 = arith.truncf %44 : vector<8x32xf32> to vector<8x32xbf16>
    %c0_14 = arith.constant 0 : index
    %c0_15 = arith.constant 0 : index
    %c0_16 = arith.constant 0 : index
    %46 = vector.load %arg3[%c0_14, %c0_15, %c0_16] : memref<1x8x32xbf16, #tpu.memory_space<vmem>>, vector<1x8x32xbf16>
    %47 = vector.shape_cast %46 : vector<1x8x32xbf16> to vector<8x32xbf16>
    %48 = vector.shape_cast %45 : vector<8x32xbf16> to vector<1x8x32xbf16>
    tpu.vector_store %arg3[%c0_14, %c0_15, %c0_16], %48 {strides = array<i32>} : memref<1x8x32xbf16, #tpu.memory_space<vmem>>, vector<1x8x32xbf16>,
    return
  }
  func.func @transform_0(%arg0: i32) -> (i32, i32, i32) {
    %c0_i32 = arith.constant 0 : i32
    %c0_i32_0 = arith.constant 0 : i32
    %c0_i32_1 = arith.constant 0 : i32
    return %arg0, %c0_i32, %c0_i32_0 : i32, i32, i32
  }
  func.func @transform_1(%arg0: i32) -> (i32, i32, i32) {
    %c0_i32 = arith.constant 0 : i32
    %c0_i32_0 = arith.constant 0 : i32
    %c0_i32_1 = arith.constant 0 : i32
    return %arg0, %c0_i32, %c0_i32_0 : i32, i32, i32
  }
  func.func @transform_2(%arg0: i32) -> (i32, i32, i32) {
    %c0_i32 = arith.constant 0 : i32
    %c0_i32_0 = arith.constant 0 : i32
    %c0_i32_1 = arith.constant 0 : i32
    return %arg0, %c0_i32, %c0_i32_0 : i32, i32, i32
  }
}

module attributes {stable_mosaic.version = 11 : i64} {
  func.func @_matmul_bias_residual_ln_kernel(%arg0: i32, %arg1: i32, %arg2: memref<16x32xbf16, #tpu.memory_space<vmem>>, %arg3: memref<32x32xbf16, #tpu.memory_space<vmem>>, %arg4: memref<1x32xf32, #tpu.memory_space<vmem>>, %arg5: memref<16x32xbf16, #tpu.memory_space<vmem>>, %arg6: memref<1x32xf32, #tpu.memory_space<vmem>>, %arg7: memref<1x32xf32, #tpu.memory_space<vmem>>, %arg8: memref<16x32xbf16, #tpu.memory_space<vmem>>, %arg9: memref<16x32xf32, #tpu.memory_space<vmem>>) attributes {dimension_semantics = [#tpu.dimension_semantics<parallel>, #tpu.dimension_semantics<arbitrary>], iteration_bounds = array<i64: 1, 1>, scalar_prefetch = 0 : i64, scratch_operands = 1 : i64, tpu.core_type = #tpu.core_type<tc>, window_params = [{transform_indices = @transform_0, window_bounds = array<i64: 16, 32>}, {transform_indices = @transform_1, window_bounds = array<i64: 32, 32>}, {pipeline_mode = #tpu.pipeline_mode<synchronous>, transform_indices = @transform_2, window_bounds = array<i64: 1, 32>}, {transform_indices = @transform_3, window_bounds = array<i64: 16, 32>}, {pipeline_mode = #tpu.pipeline_mode<synchronous>, transform_indices = @transform_4, window_bounds = array<i64: 1, 32>}, {pipeline_mode = #tpu.pipeline_mode<synchronous>, transform_indices = @transform_5, window_bounds = array<i64: 1, 32>}, {transform_indices = @transform_6, window_bounds = array<i64: 16, 32>}]} {
    %c0_i32 = arith.constant 0 : i32
    %0 = arith.cmpi eq, %arg1, %c0_i32 : i32
    %1 = arith.extui %0 : i1 to i32
    %c0_i32_0 = arith.constant 0 : i32
    %2 = arith.cmpi ne, %1, %c0_i32_0 : i32
    scf.if %2 {
      %cst_10 = arith.constant 0.000000e+00 : f32
      %12 = vector.broadcast %cst_10 : f32 to vector<16x32xf32>
      %c0_11 = arith.constant 0 : index
      %c0_12 = arith.constant 0 : index
      %13 = vector.load %arg9[%c0_11, %c0_12] : memref<16x32xf32, #tpu.memory_space<vmem>>, vector<16x32xf32>
      tpu.vector_store %arg9[%c0_11, %c0_12], %12 {strides = array<i32>} : memref<16x32xf32, #tpu.memory_space<vmem>>, vector<16x32xf32>,
    } else {
    }
    %c0 = arith.constant 0 : index
    %c0_1 = arith.constant 0 : index
    %3 = vector.load %arg9[%c0, %c0_1] : memref<16x32xf32, #tpu.memory_space<vmem>>, vector<16x32xf32>
    %c0_2 = arith.constant 0 : index
    %c0_3 = arith.constant 0 : index
    %4 = vector.load %arg2[%c0_2, %c0_3] : memref<16x32xbf16, #tpu.memory_space<vmem>>, vector<16x32xbf16>
    %c0_4 = arith.constant 0 : index
    %c0_5 = arith.constant 0 : index
    %5 = vector.load %arg3[%c0_4, %c0_5] : memref<32x32xbf16, #tpu.memory_space<vmem>>, vector<32x32xbf16>
    %cst = arith.constant dense<0.000000e+00> : vector<16x32xf32>
    %6 = tpu.matmul %4, %5, %cst {dimension_numbers = #tpu.dot_dimension_numbers<[1], [0], [0], [1], [0, 0, 1, 1], [], []>} : vector<16x32xbf16>, vector<32x32xbf16>, vector<16x32xf32> -> vector<16x32xf32>
    %7 = arith.addf %3, %6 : vector<16x32xf32>
    %c0_6 = arith.constant 0 : index
    %c0_7 = arith.constant 0 : index
    %8 = vector.load %arg9[%c0_6, %c0_7] : memref<16x32xf32, #tpu.memory_space<vmem>>, vector<16x32xf32>
    tpu.vector_store %arg9[%c0_6, %c0_7], %7 {strides = array<i32>} : memref<16x32xf32, #tpu.memory_space<vmem>>, vector<16x32xf32>,
    %c0_i32_8 = arith.constant 0 : i32
    %9 = arith.cmpi eq, %arg1, %c0_i32_8 : i32
    %10 = arith.extui %9 : i1 to i32
    %c0_i32_9 = arith.constant 0 : i32
    %11 = arith.cmpi ne, %10, %c0_i32_9 : i32
    scf.if %11 {
      %c0_10 = arith.constant 0 : index
      %c0_11 = arith.constant 0 : index
      %12 = vector.load %arg9[%c0_10, %c0_11] : memref<16x32xf32, #tpu.memory_space<vmem>>, vector<16x32xf32>
      %c0_12 = arith.constant 0 : index
      %c0_13 = arith.constant 0 : index
      %13 = vector.load %arg4[%c0_12, %c0_13] : memref<1x32xf32, #tpu.memory_space<vmem>>, vector<1x32xf32>
      %14 = vector.broadcast %13 : vector<1x32xf32> to vector<16x32xf32>
      %15 = arith.addf %12, %14 : vector<16x32xf32>
      %c0_14 = arith.constant 0 : index
      %c0_15 = arith.constant 0 : index
      %16 = vector.load %arg5[%c0_14, %c0_15] : memref<16x32xbf16, #tpu.memory_space<vmem>>, vector<16x32xbf16>
      %17 = arith.extf %16 : vector<16x32xbf16> to vector<16x32xf32>
      %18 = arith.addf %15, %17 : vector<16x32xf32>
      %cst_16 = arith.constant dense<0.000000e+00> : vector<16xf32>
      %19 = vector.multi_reduction <add>, %18, %cst_16 [1] : vector<16x32xf32> to vector<16xf32>
      %20 = vector.shape_cast %19 : vector<16xf32> to vector<16x1xf32>
      %cst_17 = arith.constant 3.200000e+01 : f32
      %21 = vector.broadcast %cst_17 : f32 to vector<16x1xf32>
      %22 = arith.divf %20, %21 : vector<16x1xf32>
      %23 = vector.broadcast %22 : vector<16x1xf32> to vector<16x32xf32>
      %24 = arith.subf %18, %23 : vector<16x32xf32>
      %25 = arith.mulf %24, %24 : vector<16x32xf32>
      %cst_18 = arith.constant dense<0.000000e+00> : vector<16xf32>
      %26 = vector.multi_reduction <add>, %25, %cst_18 [1] : vector<16x32xf32> to vector<16xf32>
      %27 = vector.shape_cast %26 : vector<16xf32> to vector<16x1xf32>
      %cst_19 = arith.constant 3.200000e+01 : f32
      %28 = vector.broadcast %cst_19 : f32 to vector<16x1xf32>
      %29 = arith.divf %27, %28 : vector<16x1xf32>
      %30 = vector.broadcast %22 : vector<16x1xf32> to vector<16x32xf32>
      %31 = arith.subf %18, %30 : vector<16x32xf32>
      %cst_20 = arith.constant 9.99999996E-13 : f32
      %32 = vector.broadcast %cst_20 : f32 to vector<16x1xf32>
      %33 = arith.addf %29, %32 : vector<16x1xf32>
      %34 = math.rsqrt %33 : vector<16x1xf32>
      %35 = vector.broadcast %34 : vector<16x1xf32> to vector<16x32xf32>
      %36 = arith.mulf %31, %35 : vector<16x32xf32>
      %c0_21 = arith.constant 0 : index
      %c0_22 = arith.constant 0 : index
      %37 = vector.load %arg6[%c0_21, %c0_22] : memref<1x32xf32, #tpu.memory_space<vmem>>, vector<1x32xf32>
      %38 = vector.broadcast %37 : vector<1x32xf32> to vector<16x32xf32>
      %39 = arith.mulf %36, %38 : vector<16x32xf32>
      %c0_23 = arith.constant 0 : index
      %c0_24 = arith.constant 0 : index
      %40 = vector.load %arg7[%c0_23, %c0_24] : memref<1x32xf32, #tpu.memory_space<vmem>>, vector<1x32xf32>
      %41 = vector.broadcast %40 : vector<1x32xf32> to vector<16x32xf32>
      %42 = arith.addf %39, %41 : vector<16x32xf32>
      %43 = arith.truncf %42 : vector<16x32xf32> to vector<16x32xbf16>
      %c0_25 = arith.constant 0 : index
      %c0_26 = arith.constant 0 : index
      %44 = vector.load %arg8[%c0_25, %c0_26] : memref<16x32xbf16, #tpu.memory_space<vmem>>, vector<16x32xbf16>
      tpu.vector_store %arg8[%c0_25, %c0_26], %43 {strides = array<i32>} : memref<16x32xbf16, #tpu.memory_space<vmem>>, vector<16x32xbf16>,
    } else {
    }
    return
  }
  func.func @transform_0(%arg0: i32, %arg1: i32) -> (i32, i32) {
    %c0_i32 = arith.constant 0 : i32
    return %arg0, %arg1 : i32, i32
  }
  func.func @transform_1(%arg0: i32, %arg1: i32) -> (i32, i32) {
    %c0_i32 = arith.constant 0 : i32
    %c0_i32_0 = arith.constant 0 : i32
    return %arg1, %c0_i32 : i32, i32
  }
  func.func @transform_2(%arg0: i32, %arg1: i32) -> (i32, i32) {
    %c0_i32 = arith.constant 0 : i32
    %c0_i32_0 = arith.constant 0 : i32
    %c0_i32_1 = arith.constant 0 : i32
    return %c0_i32, %c0_i32_0 : i32, i32
  }
  func.func @transform_3(%arg0: i32, %arg1: i32) -> (i32, i32) {
    %c0_i32 = arith.constant 0 : i32
    %c0_i32_0 = arith.constant 0 : i32
    return %arg0, %c0_i32 : i32, i32
  }
  func.func @transform_4(%arg0: i32, %arg1: i32) -> (i32, i32) {
    %c0_i32 = arith.constant 0 : i32
    %c0_i32_0 = arith.constant 0 : i32
    %c0_i32_1 = arith.constant 0 : i32
    return %c0_i32, %c0_i32_0 : i32, i32
  }
  func.func @transform_5(%arg0: i32, %arg1: i32) -> (i32, i32) {
    %c0_i32 = arith.constant 0 : i32
    %c0_i32_0 = arith.constant 0 : i32
    %c0_i32_1 = arith.constant 0 : i32
    return %c0_i32, %c0_i32_0 : i32, i32
  }
  func.func @transform_6(%arg0: i32, %arg1: i32) -> (i32, i32) {
    %c0_i32 = arith.constant 0 : i32
    %c0_i32_0 = arith.constant 0 : i32
    return %arg0, %c0_i32 : i32, i32
  }
}

module attributes {stable_mosaic.version = 11 : i64} {
  func.func @_matmul_bias_kernel(%arg0: i32, %arg1: i32, %arg2: i32, %arg3: memref<16x32xbf16, #tpu.memory_space<vmem>>, %arg4: memref<32x64xbf16, #tpu.memory_space<vmem>>, %arg5: memref<1x64xf32, #tpu.memory_space<vmem>>, %arg6: memref<16x64xbf16, #tpu.memory_space<vmem>>, %arg7: memref<16x64xf32, #tpu.memory_space<vmem>>) attributes {dimension_semantics = [#tpu.dimension_semantics<parallel>, #tpu.dimension_semantics<parallel>, #tpu.dimension_semantics<arbitrary>], iteration_bounds = array<i64: 1, 1, 1>, scalar_prefetch = 0 : i64, scratch_operands = 1 : i64, tpu.core_type = #tpu.core_type<tc>, window_params = [{transform_indices = @transform_0, window_bounds = array<i64: 16, 32>}, {transform_indices = @transform_1, window_bounds = array<i64: 32, 64>}, {transform_indices = @transform_2, window_bounds = array<i64: 1, 64>}, {transform_indices = @transform_3, window_bounds = array<i64: 16, 64>}]} {
    %c0_i32 = arith.constant 0 : i32
    %0 = arith.cmpi eq, %arg2, %c0_i32 : i32
    %1 = arith.extui %0 : i1 to i32
    %c0_i32_0 = arith.constant 0 : i32
    %2 = arith.cmpi ne, %1, %c0_i32_0 : i32
    scf.if %2 {
      %cst_10 = arith.constant 0.000000e+00 : f32
      %12 = vector.broadcast %cst_10 : f32 to vector<16x64xf32>
      %c0_11 = arith.constant 0 : index
      %c0_12 = arith.constant 0 : index
      %13 = vector.load %arg7[%c0_11, %c0_12] : memref<16x64xf32, #tpu.memory_space<vmem>>, vector<16x64xf32>
      tpu.vector_store %arg7[%c0_11, %c0_12], %12 {strides = array<i32>} : memref<16x64xf32, #tpu.memory_space<vmem>>, vector<16x64xf32>,
    } else {
    }
    %c0 = arith.constant 0 : index
    %c0_1 = arith.constant 0 : index
    %3 = vector.load %arg7[%c0, %c0_1] : memref<16x64xf32, #tpu.memory_space<vmem>>, vector<16x64xf32>
    %c0_2 = arith.constant 0 : index
    %c0_3 = arith.constant 0 : index
    %4 = vector.load %arg3[%c0_2, %c0_3] : memref<16x32xbf16, #tpu.memory_space<vmem>>, vector<16x32xbf16>
    %c0_4 = arith.constant 0 : index
    %c0_5 = arith.constant 0 : index
    %5 = vector.load %arg4[%c0_4, %c0_5] : memref<32x64xbf16, #tpu.memory_space<vmem>>, vector<32x64xbf16>
    %cst = arith.constant dense<0.000000e+00> : vector<16x64xf32>
    %6 = tpu.matmul %4, %5, %cst {dimension_numbers = #tpu.dot_dimension_numbers<[1], [0], [0], [1], [0, 0, 1, 1], [], []>} : vector<16x32xbf16>, vector<32x64xbf16>, vector<16x64xf32> -> vector<16x64xf32>
    %7 = arith.addf %3, %6 : vector<16x64xf32>
    %c0_6 = arith.constant 0 : index
    %c0_7 = arith.constant 0 : index
    %8 = vector.load %arg7[%c0_6, %c0_7] : memref<16x64xf32, #tpu.memory_space<vmem>>, vector<16x64xf32>
    tpu.vector_store %arg7[%c0_6, %c0_7], %7 {strides = array<i32>} : memref<16x64xf32, #tpu.memory_space<vmem>>, vector<16x64xf32>,
    %c0_i32_8 = arith.constant 0 : i32
    %9 = arith.cmpi eq, %arg2, %c0_i32_8 : i32
    %10 = arith.extui %9 : i1 to i32
    %c0_i32_9 = arith.constant 0 : i32
    %11 = arith.cmpi ne, %10, %c0_i32_9 : i32
    scf.if %11 {
      %c0_10 = arith.constant 0 : index
      %c0_11 = arith.constant 0 : index
      %12 = vector.load %arg7[%c0_10, %c0_11] : memref<16x64xf32, #tpu.memory_space<vmem>>, vector<16x64xf32>
      %c0_12 = arith.constant 0 : index
      %c0_13 = arith.constant 0 : index
      %13 = vector.load %arg5[%c0_12, %c0_13] : memref<1x64xf32, #tpu.memory_space<vmem>>, vector<1x64xf32>
      %14 = vector.broadcast %13 : vector<1x64xf32> to vector<16x64xf32>
      %15 = arith.addf %12, %14 : vector<16x64xf32>
      %16 = arith.mulf %15, %15 : vector<16x64xf32>
      %17 = arith.mulf %15, %16 : vector<16x64xf32>
      %cst_14 = arith.constant 4.471500e-02 : f32
      %18 = vector.broadcast %cst_14 : f32 to vector<16x64xf32>
      %19 = arith.mulf %18, %17 : vector<16x64xf32>
      %20 = arith.addf %15, %19 : vector<16x64xf32>
      %cst_15 = arith.constant 0.797884583 : f32
      %21 = vector.broadcast %cst_15 : f32 to vector<16x64xf32>
      %22 = arith.mulf %21, %20 : vector<16x64xf32>
      %23 = math.tanh %22 : vector<16x64xf32>
      %cst_16 = arith.constant 1.000000e+00 : f32
      %24 = vector.broadcast %cst_16 : f32 to vector<16x64xf32>
      %25 = arith.addf %24, %23 : vector<16x64xf32>
      %cst_17 = arith.constant 5.000000e-01 : f32
      %26 = vector.broadcast %cst_17 : f32 to vector<16x64xf32>
      %27 = arith.mulf %26, %25 : vector<16x64xf32>
      %28 = arith.mulf %15, %27 : vector<16x64xf32>
      %29 = arith.truncf %28 : vector<16x64xf32> to vector<16x64xbf16>
      %c0_18 = arith.constant 0 : index
      %c0_19 = arith.constant 0 : index
      %30 = vector.load %arg6[%c0_18, %c0_19] : memref<16x64xbf16, #tpu.memory_space<vmem>>, vector<16x64xbf16>
      tpu.vector_store %arg6[%c0_18, %c0_19], %29 {strides = array<i32>} : memref<16x64xbf16, #tpu.memory_space<vmem>>, vector<16x64xbf16>,
    } else {
    }
    return
  }
  func.func @transform_0(%arg0: i32, %arg1: i32, %arg2: i32) -> (i32, i32) {
    %c0_i32 = arith.constant 0 : i32
    return %arg0, %arg2 : i32, i32
  }
  func.func @transform_1(%arg0: i32, %arg1: i32, %arg2: i32) -> (i32, i32) {
    %c0_i32 = arith.constant 0 : i32
    return %arg2, %arg1 : i32, i32
  }
  func.func @transform_2(%arg0: i32, %arg1: i32, %arg2: i32) -> (i32, i32) {
    %c0_i32 = arith.constant 0 : i32
    %c0_i32_0 = arith.constant 0 : i32
    return %c0_i32, %arg1 : i32, i32
  }
  func.func @transform_3(%arg0: i32, %arg1: i32, %arg2: i32) -> (i32, i32) {
    %c0_i32 = arith.constant 0 : i32
    return %arg0, %arg1 : i32, i32
  }
}

module attributes {stable_mosaic.version = 11 : i64} {
  func.func @_matmul_bias_residual_ln_kernel(%arg0: i32, %arg1: i32, %arg2: memref<16x64xbf16, #tpu.memory_space<vmem>>, %arg3: memref<64x32xbf16, #tpu.memory_space<vmem>>, %arg4: memref<1x32xf32, #tpu.memory_space<vmem>>, %arg5: memref<16x32xbf16, #tpu.memory_space<vmem>>, %arg6: memref<1x32xf32, #tpu.memory_space<vmem>>, %arg7: memref<1x32xf32, #tpu.memory_space<vmem>>, %arg8: memref<16x32xbf16, #tpu.memory_space<vmem>>, %arg9: memref<16x32xf32, #tpu.memory_space<vmem>>) attributes {dimension_semantics = [#tpu.dimension_semantics<parallel>, #tpu.dimension_semantics<arbitrary>], iteration_bounds = array<i64: 1, 1>, scalar_prefetch = 0 : i64, scratch_operands = 1 : i64, tpu.core_type = #tpu.core_type<tc>, window_params = [{transform_indices = @transform_0, window_bounds = array<i64: 16, 64>}, {transform_indices = @transform_1, window_bounds = array<i64: 64, 32>}, {pipeline_mode = #tpu.pipeline_mode<synchronous>, transform_indices = @transform_2, window_bounds = array<i64: 1, 32>}, {transform_indices = @transform_3, window_bounds = array<i64: 16, 32>}, {pipeline_mode = #tpu.pipeline_mode<synchronous>, transform_indices = @transform_4, window_bounds = array<i64: 1, 32>}, {pipeline_mode = #tpu.pipeline_mode<synchronous>, transform_indices = @transform_5, window_bounds = array<i64: 1, 32>}, {transform_indices = @transform_6, window_bounds = array<i64: 16, 32>}]} {
    %c0_i32 = arith.constant 0 : i32
    %0 = arith.cmpi eq, %arg1, %c0_i32 : i32
    %1 = arith.extui %0 : i1 to i32
    %c0_i32_0 = arith.constant 0 : i32
    %2 = arith.cmpi ne, %1, %c0_i32_0 : i32
    scf.if %2 {
      %cst_10 = arith.constant 0.000000e+00 : f32
      %12 = vector.broadcast %cst_10 : f32 to vector<16x32xf32>
      %c0_11 = arith.constant 0 : index
      %c0_12 = arith.constant 0 : index
      %13 = vector.load %arg9[%c0_11, %c0_12] : memref<16x32xf32, #tpu.memory_space<vmem>>, vector<16x32xf32>
      tpu.vector_store %arg9[%c0_11, %c0_12], %12 {strides = array<i32>} : memref<16x32xf32, #tpu.memory_space<vmem>>, vector<16x32xf32>,
    } else {
    }
    %c0 = arith.constant 0 : index
    %c0_1 = arith.constant 0 : index
    %3 = vector.load %arg9[%c0, %c0_1] : memref<16x32xf32, #tpu.memory_space<vmem>>, vector<16x32xf32>
    %c0_2 = arith.constant 0 : index
    %c0_3 = arith.constant 0 : index
    %4 = vector.load %arg2[%c0_2, %c0_3] : memref<16x64xbf16, #tpu.memory_space<vmem>>, vector<16x64xbf16>
    %c0_4 = arith.constant 0 : index
    %c0_5 = arith.constant 0 : index
    %5 = vector.load %arg3[%c0_4, %c0_5] : memref<64x32xbf16, #tpu.memory_space<vmem>>, vector<64x32xbf16>
    %cst = arith.constant dense<0.000000e+00> : vector<16x32xf32>
    %6 = tpu.matmul %4, %5, %cst {dimension_numbers = #tpu.dot_dimension_numbers<[1], [0], [0], [1], [0, 0, 1, 1], [], []>} : vector<16x64xbf16>, vector<64x32xbf16>, vector<16x32xf32> -> vector<16x32xf32>
    %7 = arith.addf %3, %6 : vector<16x32xf32>
    %c0_6 = arith.constant 0 : index
    %c0_7 = arith.constant 0 : index
    %8 = vector.load %arg9[%c0_6, %c0_7] : memref<16x32xf32, #tpu.memory_space<vmem>>, vector<16x32xf32>
    tpu.vector_store %arg9[%c0_6, %c0_7], %7 {strides = array<i32>} : memref<16x32xf32, #tpu.memory_space<vmem>>, vector<16x32xf32>,
    %c0_i32_8 = arith.constant 0 : i32
    %9 = arith.cmpi eq, %arg1, %c0_i32_8 : i32
    %10 = arith.extui %9 : i1 to i32
    %c0_i32_9 = arith.constant 0 : i32
    %11 = arith.cmpi ne, %10, %c0_i32_9 : i32
    scf.if %11 {
      %c0_10 = arith.constant 0 : index
      %c0_11 = arith.constant 0 : index
      %12 = vector.load %arg9[%c0_10, %c0_11] : memref<16x32xf32, #tpu.memory_space<vmem>>, vector<16x32xf32>
      %c0_12 = arith.constant 0 : index
      %c0_13 = arith.constant 0 : index
      %13 = vector.load %arg4[%c0_12, %c0_13] : memref<1x32xf32, #tpu.memory_space<vmem>>, vector<1x32xf32>
      %14 = vector.broadcast %13 : vector<1x32xf32> to vector<16x32xf32>
      %15 = arith.addf %12, %14 : vector<16x32xf32>
      %c0_14 = arith.constant 0 : index
      %c0_15 = arith.constant 0 : index
      %16 = vector.load %arg5[%c0_14, %c0_15] : memref<16x32xbf16, #tpu.memory_space<vmem>>, vector<16x32xbf16>
      %17 = arith.extf %16 : vector<16x32xbf16> to vector<16x32xf32>
      %18 = arith.addf %15, %17 : vector<16x32xf32>
      %cst_16 = arith.constant dense<0.000000e+00> : vector<16xf32>
      %19 = vector.multi_reduction <add>, %18, %cst_16 [1] : vector<16x32xf32> to vector<16xf32>
      %20 = vector.shape_cast %19 : vector<16xf32> to vector<16x1xf32>
      %cst_17 = arith.constant 3.200000e+01 : f32
      %21 = vector.broadcast %cst_17 : f32 to vector<16x1xf32>
      %22 = arith.divf %20, %21 : vector<16x1xf32>
      %23 = vector.broadcast %22 : vector<16x1xf32> to vector<16x32xf32>
      %24 = arith.subf %18, %23 : vector<16x32xf32>
      %25 = arith.mulf %24, %24 : vector<16x32xf32>
      %cst_18 = arith.constant dense<0.000000e+00> : vector<16xf32>
      %26 = vector.multi_reduction <add>, %25, %cst_18 [1] : vector<16x32xf32> to vector<16xf32>
      %27 = vector.shape_cast %26 : vector<16xf32> to vector<16x1xf32>
      %cst_19 = arith.constant 3.200000e+01 : f32
      %28 = vector.broadcast %cst_19 : f32 to vector<16x1xf32>
      %29 = arith.divf %27, %28 : vector<16x1xf32>
      %30 = vector.broadcast %22 : vector<16x1xf32> to vector<16x32xf32>
      %31 = arith.subf %18, %30 : vector<16x32xf32>
      %cst_20 = arith.constant 9.99999996E-13 : f32
      %32 = vector.broadcast %cst_20 : f32 to vector<16x1xf32>
      %33 = arith.addf %29, %32 : vector<16x1xf32>
      %34 = math.rsqrt %33 : vector<16x1xf32>
      %35 = vector.broadcast %34 : vector<16x1xf32> to vector<16x32xf32>
      %36 = arith.mulf %31, %35 : vector<16x32xf32>
      %c0_21 = arith.constant 0 : index
      %c0_22 = arith.constant 0 : index
      %37 = vector.load %arg6[%c0_21, %c0_22] : memref<1x32xf32, #tpu.memory_space<vmem>>, vector<1x32xf32>
      %38 = vector.broadcast %37 : vector<1x32xf32> to vector<16x32xf32>
      %39 = arith.mulf %36, %38 : vector<16x32xf32>
      %c0_23 = arith.constant 0 : index
      %c0_24 = arith.constant 0 : index
      %40 = vector.load %arg7[%c0_23, %c0_24] : memref<1x32xf32, #tpu.memory_space<vmem>>, vector<1x32xf32>
      %41 = vector.broadcast %40 : vector<1x32xf32> to vector<16x32xf32>
      %42 = arith.addf %39, %41 : vector<16x32xf32>
      %43 = arith.truncf %42 : vector<16x32xf32> to vector<16x32xbf16>
      %c0_25 = arith.constant 0 : index
      %c0_26 = arith.constant 0 : index
      %44 = vector.load %arg8[%c0_25, %c0_26] : memref<16x32xbf16, #tpu.memory_space<vmem>>, vector<16x32xbf16>
      tpu.vector_store %arg8[%c0_25, %c0_26], %43 {strides = array<i32>} : memref<16x32xbf16, #tpu.memory_space<vmem>>, vector<16x32xbf16>,
    } else {
    }
    return
  }
  func.func @transform_0(%arg0: i32, %arg1: i32) -> (i32, i32) {
    %c0_i32 = arith.constant 0 : i32
    return %arg0, %arg1 : i32, i32
  }
  func.func @transform_1(%arg0: i32, %arg1: i32) -> (i32, i32) {
    %c0_i32 = arith.constant 0 : i32
    %c0_i32_0 = arith.constant 0 : i32
    return %arg1, %c0_i32 : i32, i32
  }
  func.func @transform_2(%arg0: i32, %arg1: i32) -> (i32, i32) {
    %c0_i32 = arith.constant 0 : i32
    %c0_i32_0 = arith.constant 0 : i32
    %c0_i32_1 = arith.constant 0 : i32
    return %c0_i32, %c0_i32_0 : i32, i32
  }
  func.func @transform_3(%arg0: i32, %arg1: i32) -> (i32, i32) {
    %c0_i32 = arith.constant 0 : i32
    %c0_i32_0 = arith.constant 0 : i32
    return %arg0, %c0_i32 : i32, i32
  }
  func.func @transform_4(%arg0: i32, %arg1: i32) -> (i32, i32) {
    %c0_i32 = arith.constant 0 : i32
    %c0_i32_0 = arith.constant 0 : i32
    %c0_i32_1 = arith.constant 0 : i32
    return %c0_i32, %c0_i32_0 : i32, i32
  }
  func.func @transform_5(%arg0: i32, %arg1: i32) -> (i32, i32) {
    %c0_i32 = arith.constant 0 : i32
    %c0_i32_0 = arith.constant 0 : i32
    %c0_i32_1 = arith.constant 0 : i32
    return %c0_i32, %c0_i32_0 : i32, i32
  }
  func.func @transform_6(%arg0: i32, %arg1: i32) -> (i32, i32) {
    %c0_i32 = arith.constant 0 : i32
    %c0_i32_0 = arith.constant 0 : i32
    return %arg0, %c0_i32 : i32, i32
  }
}

module attributes {stable_mosaic.version = 11 : i64} {
  func.func @_pooler_classifier_kernel(%arg0: memref<2x32xbf16, #tpu.memory_space<vmem>>, %arg1: memref<32x32xbf16, #tpu.memory_space<vmem>>, %arg2: memref<1x32xf32, #tpu.memory_space<vmem>>, %arg3: memref<32x128xbf16, #tpu.memory_space<vmem>>, %arg4: memref<1x128xf32, #tpu.memory_space<vmem>>, %arg5: memref<2x128xf32, #tpu.memory_space<vmem>>) attributes {dimension_semantics = [], scalar_prefetch = 0 : i64, scratch_operands = 0 : i64, tpu.core_type = #tpu.core_type<tc>} {
    %c0 = arith.constant 0 : index
    %c0_0 = arith.constant 0 : index
    %0 = vector.load %arg0[%c0, %c0_0] : memref<2x32xbf16, #tpu.memory_space<vmem>>, vector<2x32xbf16>
    %c0_1 = arith.constant 0 : index
    %c0_2 = arith.constant 0 : index
    %1 = vector.load %arg1[%c0_1, %c0_2] : memref<32x32xbf16, #tpu.memory_space<vmem>>, vector<32x32xbf16>
    %cst = arith.constant dense<0.000000e+00> : vector<2x32xf32>
    %2 = tpu.matmul %0, %1, %cst {dimension_numbers = #tpu.dot_dimension_numbers<[1], [0], [0], [1], [0, 0, 1, 1], [], []>} : vector<2x32xbf16>, vector<32x32xbf16>, vector<2x32xf32> -> vector<2x32xf32>
    %c0_3 = arith.constant 0 : index
    %c0_4 = arith.constant 0 : index
    %3 = vector.load %arg2[%c0_3, %c0_4] : memref<1x32xf32, #tpu.memory_space<vmem>>, vector<1x32xf32>
    %4 = vector.broadcast %3 : vector<1x32xf32> to vector<2x32xf32>
    %5 = arith.addf %2, %4 : vector<2x32xf32>
    %6 = math.tanh %5 : vector<2x32xf32>
    %7 = arith.truncf %6 : vector<2x32xf32> to vector<2x32xbf16>
    %c0_5 = arith.constant 0 : index
    %c0_6 = arith.constant 0 : index
    %8 = vector.load %arg3[%c0_5, %c0_6] : memref<32x128xbf16, #tpu.memory_space<vmem>>, vector<32x128xbf16>
    %cst_7 = arith.constant dense<0.000000e+00> : vector<2x128xf32>
    %9 = tpu.matmul %7, %8, %cst_7 {dimension_numbers = #tpu.dot_dimension_numbers<[1], [0], [0], [1], [0, 0, 1, 1], [], []>} : vector<2x32xbf16>, vector<32x128xbf16>, vector<2x128xf32> -> vector<2x128xf32>
    %c0_8 = arith.constant 0 : index
    %c0_9 = arith.constant 0 : index
    %10 = vector.load %arg4[%c0_8, %c0_9] : memref<1x128xf32, #tpu.memory_space<vmem>>, vector<1x128xf32>
    %11 = vector.broadcast %10 : vector<1x128xf32> to vector<2x128xf32>
    %12 = arith.addf %9, %11 : vector<2x128xf32>
    %c0_10 = arith.constant 0 : index
    %c0_11 = arith.constant 0 : index
    %13 = vector.load %arg5[%c0_10, %c0_11] : memref<2x128xf32, #tpu.memory_space<vmem>>, vector<2x128xf32>
    tpu.vector_store %arg5[%c0_10, %c0_11], %12 {strides = array<i32>} : memref<2x128xf32, #tpu.memory_space<vmem>>, vector<2x128xf32>,
    return
  }
}

</mosaic_0001>

<llo_original>
// kernel: bert_classifier_forward.13
$region0: #{bert_classifier_forward.13}
  #allocation0 [shape = 'u32[]', space=smem, size = 0x4, offset = 0x4, fixed_abs, tag = 'smem constant byte address 0x4 - core index']
  #allocation1 [shape = 'u32[144,128]{1,0:T(1,128)}', space=vmem, size = 0x12000, scoped, tag = 'internal scratch']
  #allocation2 [shape = 'f32[16,96]{1,0:T(8,128)}', space=vmem, size = 0x2000, scoped, tag = 'scratch operand']
  %s0 = inlined_call_operand.vmem [shape: bf16[16,32], index: 0, kind: input, shape index: {}]
  %s1 = inlined_call_operand.vmem [shape: bf16[32,96], index: 1, kind: input, shape index: {}]
  %s2 = inlined_call_operand.vmem [shape: f32[1,96], index: 2, kind: input, shape index: {}]
  %s3 = inlined_call_operand.vmem [shape: bf16[16,96], index: 3, kind: output, shape index: {}]
  %s4 = sld [smem:[#allocation0]]
  $region30: #{bert_classifier_forward.13} parent=0
    _
  %s6 = ssub.s32 1, %s4
  %s7 = scalar_select 0, %s6, %s4
  // Predicated region
  $region2: #{bert_classifier_forward.13} parent=0 // pred_check
    _
  $region3: #{bert_classifier_forward.13} parent=0 // pred_check_branch
    %9 = sbr.rel (0) target = $region5
  $region4: #{bert_classifier_forward.13} parent=0 // pred_region
    _
  $region5: #{bert_classifier_forward.13} parent=0 // pred_fallthru
    _
  // Predicated region
  $region6: #{bert_classifier_forward.13} parent=0 // pred_check
    _
  $region7: #{bert_classifier_forward.13} parent=0 // pred_check_branch
    %11 = sbr.rel (0) target = $region9
  $region8: #{bert_classifier_forward.13} parent=0 // pred_region
    _
  $region9: #{bert_classifier_forward.13} parent=0 // pred_fallthru
    _
  // Predicated region
  $region10: #{bert_classifier_forward.13} parent=0 // pred_check
    _
  $region11: #{bert_classifier_forward.13} parent=0 // pred_check_branch
    %13 = sbr.rel (0) target = $region13
  $region12: #{bert_classifier_forward.13} parent=0 // pred_region
    _
  $region13: #{bert_classifier_forward.13} parent=0 // pred_fallthru
    _
  %p15 = scmp.eq.s32.totalorder 0, 0
  // Predicated region
  $region14: #{bert_classifier_forward.13} parent=0 // pred_check
    %p16 = pneg %p15
  $region15: #{bert_classifier_forward.13} parent=0 // pred_check_branch
    %18 = sbr.rel (%p16) target = $region17
  $region16: #{bert_classifier_forward.13} parent=0 // pred_region
    %vm19 = vcmask 785408
    %20 = vst.msk [vmem:[#allocation2] sm:$0xff] %vm19, 0.0
    %21 = vst.msk [vmem:[#allocation2 + $0x8] sm:$0xff] %vm19, 0.0
  $region17: #{bert_classifier_forward.13} parent=0 // pred_fallthru
    _
  %v22 = vld [vmem:[#allocation2] sm:$0xff]
  %v23 = vld [vmem:[#allocation2 + $0x8] sm:$0xff]
  %v24 = vld [vmem:[%s0] sm:$0xf]
  %v25 = vld [vmem:[%s0 + $0x4] sm:$0xf]
  %v26 = vld [vmem:[%s1] sm:$0xf]
  %v27 = vld [vmem:[%s1 + $0x4] sm:$0xf]
  %v28 = vld [vmem:[%s1 + $0x8] sm:$0xf]
  %v29 = vld [vmem:[%s1 + $0xc] sm:$0xf]
  %v32 = vunpack.c.l.b16 %v24
  %v33 = vunpack.c.l.b16 %v25
  %v34 = vpack.c.b16 %v33, %v32
  %v39 = vunpack.c.l.b16 %v26
  %v40 = vunpack.c.l.b16 %v27
  %v41 = vunpack.c.l.b16 %v28
  %v42 = vunpack.c.l.b16 %v29
  %v43 = vpack.c.b16 %v40, %v39
  %v44 = vpack.c.b16 %v42, %v41
  %vm47 = vcmask 261120
  %v49 = vsel %vm47, %v34, 0
  %51 = vmatprep.subr.bf16.mxu0 0
  %52 = vmatpush1.bf16.msra.mxu0 0
  %53 = vmatprep.subr.bf16.mxu0 0
  %54 = vmatpush1.bf16.msra.mxu0 0
  %55 = vmatprep.subr.bf16.mxu0 0
  %56 = vmatpush1.bf16.msra.mxu0 0
  %57 = vmatprep.subr.bf16.mxu0 0
  %58 = vmatpush1.bf16.msra.mxu0 0
  %59 = vmatprep.subr.bf16.mxu0 0
  %60 = vmatpush1.bf16.msra.mxu0 0
  %61 = vmatprep.subr.bf16.mxu0 0
  %62 = vmatpush1.bf16.msra.mxu0 0
  %63 = vmatprep.subr.bf16.mxu0 0
  %64 = vmatpush1.bf16.msra.mxu0 %v44
  %65 = vmatprep.subr.bf16.mxu0 0
  %66 = vmatpush1.bf16.msra.mxu0 %v43
  %67 = vmatprep.subr.bf16.mxu0 0
  %68 = vmatpush2.bf16.msra.mxu0 0
  %69 = vmatprep.subr.bf16.mxu0 0
  %70 = vmatpush2.bf16.msra.mxu0 0
  %71 = vmatprep.subr.bf16.mxu0 0
  %72 = vmatpush2.bf16.msra.mxu0 0
  %73 = vmatprep.subr.bf16.mxu0 0
  %74 = vmatpush2.bf16.msra.mxu0 0
  %75 = vmatprep.subr.bf16.mxu0 0
  %76 = vmatpush2.bf16.msra.mxu0 0
  %77 = vmatprep.subr.bf16.mxu0 0
  %78 = vmatpush2.bf16.msra.mxu0 0
  %79 = vmatprep.subr.bf16.mxu0 0
  %80 = vmatpush2.bf16.msra.mxu0 0
  %81 = vmatprep.subr.bf16.mxu0 0
  %82 = vmatpush2.bf16.msra.mxu0 0
  %83 = vmatprep.mubr.bf16.mxu0 0
  %84 = vmatmul.mubr.bf16.gmra.mxu0 %v49
  %v85 = vpop.f32.mrf.mxu0
  %v86 = vadd.f32 0.0, %v85
  %v87 = vpop.f32.mrf.mxu0
  %v88 = vpop.f32.mrf.mxu0
  %v89 = vadd.f32 0.0, %v88
  %v90 = vpop.f32.mrf.mxu0
  %91 = vdwg.mxu0
  %v92 = vadd.f32 %v22, %v86
  %v93 = vadd.f32 %v23, %v89
  %vm94 = vcmask 785408
  %95 = vst.msk [vmem:[#allocation2] sm:$0xff] %vm94, %v92
  %96 = vst.msk [vmem:[#allocation2 + $0x8] sm:$0xff] %vm94, %v93
  // Predicated region
  $region18: #{bert_classifier_forward.13} parent=0 // pred_check
    %p97 = pneg %p15
  $region19: #{bert_classifier_forward.13} parent=0 // pred_check_branch
    %99 = sbr.rel (%p97) target = $region21
  $region20: #{bert_classifier_forward.13} parent=0 // pred_region
    %v100 = vld [vmem:[#allocation2] sm:$0xff]
    %v101 = vld [vmem:[#allocation2 + $0x8] sm:$0xff]
    %v102 = vld [vmem:[%s2] sm:$0x1]
    %v104 = vlaneseq
    %v105 = vshrl.u32 %v104, 7
    %v106 = vsub.s32 0, %v105
    %v107 = vrot.slane %v102, %v106
    %v109 = vadd.f32 %v100, %v107
    %v110 = vadd.f32 %v101, %v107
    %v111 = vpack.c.bf16 %v110, %v109
    %v113 = vunpack.c.l.b16 %v111
    %v114 = vunpack.c.h.b16 %v111
    %v115 = vpack.c.b16 %v113, %v113
    %v116 = vpack.c.b16 %v114, %v114
    %vm119 = vcmask 781312
    %120 = vst.msk [vmem:[%s3] sm:$0xf] %vm119, %v115
    %121 = vst.msk [vmem:[%s3 + $0x4] sm:$0xf] %vm119, %v116
  $region21: #{bert_classifier_forward.13} parent=0 // pred_fallthru
    _
  // Predicated region
  $region22: #{bert_classifier_forward.13} parent=0 // pred_check
    _
  $region23: #{bert_classifier_forward.13} parent=0 // pred_check_branch
    %123 = sbr.rel (0) target = $region25
  $region24: #{bert_classifier_forward.13} parent=0 // pred_region
    _
  $region25: #{bert_classifier_forward.13} parent=0 // pred_fallthru
    _
  // Predicated region
  $region26: #{bert_classifier_forward.13} parent=0 // pred_check
    _
  $region27: #{bert_classifier_forward.13} parent=0 // pred_check_branch
    %125 = sbr.rel (0) target = $region29
  $region28: #{bert_classifier_forward.13} parent=0 // pred_region
    _
  $region29: #{bert_classifier_forward.13} parent=0 // pred_fallthru
    _

// kernel: bert_classifier_forward.12
$region0: #{bert_classifier_forward.12}
  #allocation0 [shape = 'u32[]', space=smem, size = 0x4, offset = 0x4, fixed_abs, tag = 'smem constant byte address 0x4 - core index']
  #allocation1 [shape = 'u32[144,128]{1,0:T(1,128)}', space=vmem, size = 0x12000, scoped, tag = 'internal scratch']
  %s0 = inlined_call_operand.vmem [shape: f32[16,32], index: 0, kind: input, shape index: {}]
  %s1 = inlined_call_operand.vmem [shape: f32[1,32], index: 1, kind: input, shape index: {}]
  %s2 = inlined_call_operand.vmem [shape: f32[1,32], index: 2, kind: input, shape index: {}]
  %s3 = inlined_call_operand.vmem [shape: bf16[16,32], index: 3, kind: output, shape index: {}]
  %s4 = sld [smem:[#allocation0]]
  $region22: #{bert_classifier_forward.12} parent=0
    _
  %s6 = ssub.s32 1, %s4
  %s7 = scalar_select 0, %s6, %s4
  // Predicated region
  $region2: #{bert_classifier_forward.12} parent=0 // pred_check
    _
  $region3: #{bert_classifier_forward.12} parent=0 // pred_check_branch
    %9 = sbr.rel (0) target = $region5
  $region4: #{bert_classifier_forward.12} parent=0 // pred_region
    _
  $region5: #{bert_classifier_forward.12} parent=0 // pred_fallthru
    _
  // Predicated region
  $region6: #{bert_classifier_forward.12} parent=0 // pred_check
    _
  $region7: #{bert_classifier_forward.12} parent=0 // pred_check_branch
    %11 = sbr.rel (0) target = $region9
  $region8: #{bert_classifier_forward.12} parent=0 // pred_region
    _
  $region9: #{bert_classifier_forward.12} parent=0 // pred_fallthru
    _
  // Predicated region
  $region10: #{bert_classifier_forward.12} parent=0 // pred_check
    _
  $region11: #{bert_classifier_forward.12} parent=0 // pred_check_branch
    %13 = sbr.rel (0) target = $region13
  $region12: #{bert_classifier_forward.12} parent=0 // pred_region
    _
  $region13: #{bert_classifier_forward.12} parent=0 // pred_fallthru
    _
  %v14 = vld [vmem:[%s0] sm:$0xff]
  %v15 = vld [vmem:[%s0 + $0x8] sm:$0xff]
  %vm16 = vcmask 261120
  %v17 = vsel %vm16, %v14, 0.0
  %18 = vadd.xlane.f32.xlu0 %v17
  %v19 = vpop.xlane.xlu0 %18
  %v20 = vsel %vm16, %v15, 0.0
  %21 = vadd.xlane.f32.xlu0 %v20
  %v22 = vpop.xlane.xlu0 %21
  %v23 = vrcp.pop 32.0
  %v24 = vmul.f32 %v19, %v23
  %v25 = vmul.f32 %v22, %v23
  %v26 = vsub.f32 %v14, %v24
  %v27 = vsub.f32 %v15, %v25
  %v28 = vmul.f32 %v26, %v26
  %v29 = vmul.f32 %v27, %v27
  %v30 = vsel %vm16, %v28, 0.0
  %31 = vadd.xlane.f32.xlu0 %v30
  %v32 = vpop.xlane.xlu0 %31
  %v33 = vsel %vm16, %v29, 0.0
  %34 = vadd.xlane.f32.xlu0 %v33
  %v35 = vpop.xlane.xlu0 %34
  %v36 = vmul.f32 %v32, %v23
  %v37 = vmul.f32 %v35, %v23
  %v38 = vadd.f32 %v36, 1e-12
  %v39 = vadd.f32 %v37, 1e-12
  %v40 = vrsqrt.pop %v38
  %v41 = vrsqrt.pop %v39
  %v42 = vmul.f32 %v26, %v40
  %v43 = vmul.f32 %v27, %v41
  %v44 = vld [vmem:[%s1] sm:$0x1]
  %v46 = vlaneseq
  %v47 = vshrl.u32 %v46, 7
  %v48 = vsub.s32 0, %v47
  %v49 = vrot.slane %v44, %v48
  %v51 = vmul.f32 %v42, %v49
  %v52 = vmul.f32 %v43, %v49
  %v53 = vld [vmem:[%s2] sm:$0x1]
  %v55 = vlaneseq
  %v56 = vshrl.u32 %v55, 7
  %v57 = vsub.s32 0, %v56
  %v58 = vrot.slane %v53, %v57
  %v60 = vadd.f32 %v51, %v58
  %v61 = vadd.f32 %v52, %v58
  %v62 = vpack.c.bf16 %v61, %v60
  %v64 = vunpack.c.l.b16 %v62
  %v65 = vunpack.c.h.b16 %v62
  %v66 = vpack.c.b16 %v64, %v64
  %v67 = vpack.c.b16 %v65, %v65
  %vm70 = vcmask 257024
  %71 = vst.msk [vmem:[%s3] sm:$0xf] %vm70, %v66
  %72 = vst.msk [vmem:[%s3 + $0x4] sm:$0xf] %vm70, %v67
  // Predicated region
  $region14: #{bert_classifier_forward.12} parent=0 // pred_check
    _
  $region15: #{bert_classifier_forward.12} parent=0 // pred_check_branch
    %74 = sbr.rel (0) target = $region17
  $region16: #{bert_classifier_forward.12} parent=0 // pred_region
    _
  $region17: #{bert_classifier_forward.12} parent=0 // pred_fallthru
    _
  // Predicated region
  $region18: #{bert_classifier_forward.12} parent=0 // pred_check
    _
  $region19: #{bert_classifier_forward.12} parent=0 // pred_check_branch
    %76 = sbr.rel (0) target = $region21
  $region20: #{bert_classifier_forward.12} parent=0 // pred_region
    _
  $region21: #{bert_classifier_forward.12} parent=0 // pred_fallthru
    _

// kernel: bert_classifier_forward.15
$region0: #{bert_classifier_forward.15}
  #allocation0 [shape = 'u32[]', space=smem, size = 0x4, offset = 0x4, fixed_abs, tag = 'smem constant byte address 0x4 - core index']
  #allocation1 [shape = 'u32[144,128]{1,0:T(1,128)}', space=vmem, size = 0x12000, scoped, tag = 'internal scratch']
  #allocation2 [shape = 'f32[16,32]{1,0:T(8,128)}', space=vmem, size = 0x2000, scoped, tag = 'scratch operand']
  %s0 = inlined_call_operand.vmem [shape: bf16[16,32], index: 0, kind: input, shape index: {}]
  %s1 = inlined_call_operand.vmem [shape: bf16[32,32], index: 1, kind: input, shape index: {}]
  %s2 = inlined_call_operand.vmem [shape: f32[1,32], index: 2, kind: input, shape index: {}]
  %s3 = inlined_call_operand.vmem [shape: bf16[16,32], index: 3, kind: input, shape index: {}]
  %s4 = inlined_call_operand.vmem [shape: f32[1,32], index: 4, kind: input, shape index: {}]
  %s5 = inlined_call_operand.vmem [shape: f32[1,32], index: 5, kind: input, shape index: {}]
  %s6 = inlined_call_operand.vmem [shape: bf16[16,32], index: 6, kind: output, shape index: {}]
  %s7 = sld [smem:[#allocation0]]
  $region42: #{bert_classifier_forward.15} parent=0
    _
  %s9 = ssub.s32 1, %s7
  %s10 = scalar_select 0, %s9, %s7
  // Predicated region
  $region2: #{bert_classifier_forward.15} parent=0 // pred_check
    _
  $region3: #{bert_classifier_forward.15} parent=0 // pred_check_branch
    %12 = sbr.rel (0) target = $region5
  $region4: #{bert_classifier_forward.15} parent=0 // pred_region
    _
  $region5: #{bert_classifier_forward.15} parent=0 // pred_fallthru
    _
  // Predicated region
  $region6: #{bert_classifier_forward.15} parent=0 // pred_check
    _
  $region7: #{bert_classifier_forward.15} parent=0 // pred_check_branch
    %14 = sbr.rel (0) target = $region9
  $region8: #{bert_classifier_forward.15} parent=0 // pred_region
    _
  $region9: #{bert_classifier_forward.15} parent=0 // pred_fallthru
    _
  // Predicated region
  $region10: #{bert_classifier_forward.15} parent=0 // pred_check
    _
  $region11: #{bert_classifier_forward.15} parent=0 // pred_check_branch
    %16 = sbr.rel (0) target = $region13
  $region12: #{bert_classifier_forward.15} parent=0 // pred_region
    _
  $region13: #{bert_classifier_forward.15} parent=0 // pred_fallthru
    _
  // Predicated region
  $region14: #{bert_classifier_forward.15} parent=0 // pred_check
    _
  $region15: #{bert_classifier_forward.15} parent=0 // pred_check_branch
    %18 = sbr.rel (0) target = $region17
  $region16: #{bert_classifier_forward.15} parent=0 // pred_region
    _
  $region17: #{bert_classifier_forward.15} parent=0 // pred_fallthru
    _
  // Predicated region
  $region18: #{bert_classifier_forward.15} parent=0 // pred_check
    _
  $region19: #{bert_classifier_forward.15} parent=0 // pred_check_branch
    %20 = sbr.rel (0) target = $region21
  $region20: #{bert_classifier_forward.15} parent=0 // pred_region
    _
  $region21: #{bert_classifier_forward.15} parent=0 // pred_fallthru
    _
  // Predicated region
  $region22: #{bert_classifier_forward.15} parent=0 // pred_check
    _
  $region23: #{bert_classifier_forward.15} parent=0 // pred_check_branch
    %22 = sbr.rel (0) target = $region25
  $region24: #{bert_classifier_forward.15} parent=0 // pred_region
    _
  $region25: #{bert_classifier_forward.15} parent=0 // pred_fallthru
    _
  %p24 = scmp.eq.s32.totalorder 0, 0
  // Predicated region
  $region26: #{bert_classifier_forward.15} parent=0 // pred_check
    %p25 = pneg %p24
  $region27: #{bert_classifier_forward.15} parent=0 // pred_check_branch
    %27 = sbr.rel (%p25) target = $region29
  $region28: #{bert_classifier_forward.15} parent=0 // pred_region
    %vm28 = vcmask 261120
    %29 = vst.msk [vmem:[#allocation2] sm:$0xff] %vm28, 0.0
    %30 = vst.msk [vmem:[#allocation2 + $0x8] sm:$0xff] %vm28, 0.0
  $region29: #{bert_classifier_forward.15} parent=0 // pred_fallthru
    _
  %v31 = vld [vmem:[#allocation2] sm:$0xff]
  %v32 = vld [vmem:[#allocation2 + $0x8] sm:$0xff]
  %v33 = vld [vmem:[%s0] sm:$0xf]
  %v34 = vld [vmem:[%s0 + $0x4] sm:$0xf]
  %v35 = vld [vmem:[%s1] sm:$0xf]
  %v36 = vld [vmem:[%s1 + $0x4] sm:$0xf]
  %v37 = vld [vmem:[%s1 + $0x8] sm:$0xf]
  %v38 = vld [vmem:[%s1 + $0xc] sm:$0xf]
  %v41 = vunpack.c.l.b16 %v33
  %v42 = vunpack.c.l.b16 %v34
  %v43 = vpack.c.b16 %v42, %v41
  %v48 = vunpack.c.l.b16 %v35
  %v49 = vunpack.c.l.b16 %v36
  %v50 = vunpack.c.l.b16 %v37
  %v51 = vunpack.c.l.b16 %v38
  %v52 = vpack.c.b16 %v49, %v48
  %v53 = vpack.c.b16 %v51, %v50
  %vm56 = vcmask 261120
  %v58 = vsel %vm56, %v43, 0
  %60 = vmatprep.subr.bf16.mxu0 0
  %61 = vmatpush1.bf16.msra.mxu0 0
  %62 = vmatprep.subr.bf16.mxu0 0
  %63 = vmatpush1.bf16.msra.mxu0 0
  %64 = vmatprep.subr.bf16.mxu0 0
  %65 = vmatpush1.bf16.msra.mxu0 0
  %66 = vmatprep.subr.bf16.mxu0 0
  %67 = vmatpush1.bf16.msra.mxu0 0
  %68 = vmatprep.subr.bf16.mxu0 0
  %69 = vmatpush1.bf16.msra.mxu0 0
  %70 = vmatprep.subr.bf16.mxu0 0
  %71 = vmatpush1.bf16.msra.mxu0 0
  %72 = vmatprep.subr.bf16.mxu0 0
  %73 = vmatpush1.bf16.msra.mxu0 %v53
  %74 = vmatprep.subr.bf16.mxu0 0
  %75 = vmatpush1.bf16.msra.mxu0 %v52
  %76 = vmatprep.subr.bf16.mxu0 0
  %77 = vmatpush2.bf16.msra.mxu0 0
  %78 = vmatprep.subr.bf16.mxu0 0
  %79 = vmatpush2.bf16.msra.mxu0 0
  %80 = vmatprep.subr.bf16.mxu0 0
  %81 = vmatpush2.bf16.msra.mxu0 0
  %82 = vmatprep.subr.bf16.mxu0 0
  %83 = vmatpush2.bf16.msra.mxu0 0
  %84 = vmatprep.subr.bf16.mxu0 0
  %85 = vmatpush2.bf16.msra.mxu0 0
  %86 = vmatprep.subr.bf16.mxu0 0
  %87 = vmatpush2.bf16.msra.mxu0 0
  %88 = vmatprep.subr.bf16.mxu0 0
  %89 = vmatpush2.bf16.msra.mxu0 0
  %90 = vmatprep.subr.bf16.mxu0 0
  %91 = vmatpush2.bf16.msra.mxu0 0
  %92 = vmatprep.mubr.bf16.mxu0 0
  %93 = vmatmul.mubr.bf16.gmra.mxu0 %v58
  %v94 = vpop.f32.mrf.mxu0
  %v95 = vadd.f32 0.0, %v94
  %v96 = vpop.f32.mrf.mxu0
  %v97 = vpop.f32.mrf.mxu0
  %v98 = vadd.f32 0.0, %v97
  %v99 = vpop.f32.mrf.mxu0
  %100 = vdwg.mxu0
  %v101 = vadd.f32 %v31, %v95
  %v102 = vadd.f32 %v32, %v98
  %103 = vst.msk [vmem:[#allocation2] sm:$0xff] %vm56, %v101
  %104 = vst.msk [vmem:[#allocation2 + $0x8] sm:$0xff] %vm56, %v102
  // Predicated region
  $region30: #{bert_classifier_forward.15} parent=0 // pred_check
    %p105 = pneg %p24
  $region31: #{bert_classifier_forward.15} parent=0 // pred_check_branch
    %107 = sbr.rel (%p105) target = $region33
  $region32: #{bert_classifier_forward.15} parent=0 // pred_region
    %v108 = vld [vmem:[#allocation2] sm:$0xff]
    %v109 = vld [vmem:[#allocation2 + $0x8] sm:$0xff]
    %v110 = vld [vmem:[%s2] sm:$0x1]
    %v112 = vlaneseq
    %v113 = vshrl.u32 %v112, 7
    %v114 = vsub.s32 0, %v113
    %v115 = vrot.slane %v110, %v114
    %v117 = vadd.f32 %v108, %v115
    %v118 = vadd.f32 %v109, %v115
    %v119 = vld [vmem:[%s3] sm:$0xf]
    %v120 = vld [vmem:[%s3 + $0x4] sm:$0xf]
    %v121 = vunpack.c.l.bf16 %v119
    %v122 = vunpack.c.l.bf16 %v120
    %v123 = vadd.f32 %v117, %v121
    %v124 = vadd.f32 %v118, %v122
    %v125 = vsel %vm56, %v123, 0.0
    %126 = vadd.xlane.f32.xlu0 %v125
    %v127 = vpop.xlane.xlu0 %126
    %v128 = vsel %vm56, %v124, 0.0
    %129 = vadd.xlane.f32.xlu0 %v128
    %v130 = vpop.xlane.xlu0 %129
    %v131 = vrcp.pop 32.0
    %v132 = vmul.f32 %v127, %v131
    %v133 = vmul.f32 %v130, %v131
    %v134 = vsub.f32 %v123, %v132
    %v135 = vsub.f32 %v124, %v133
    %v136 = vmul.f32 %v134, %v134
    %v137 = vmul.f32 %v135, %v135
    %v138 = vsel %vm56, %v136, 0.0
    %139 = vadd.xlane.f32.xlu0 %v138
    %v140 = vpop.xlane.xlu0 %139
    %v141 = vsel %vm56, %v137, 0.0
    %142 = vadd.xlane.f32.xlu0 %v141
    %v143 = vpop.xlane.xlu0 %142
    %v144 = vmul.f32 %v140, %v131
    %v145 = vmul.f32 %v143, %v131
    %v146 = vadd.f32 %v144, 1e-12
    %v147 = vadd.f32 %v145, 1e-12
    %v148 = vrsqrt.pop %v146
    %v149 = vrsqrt.pop %v147
    %v150 = vmul.f32 %v134, %v148
    %v151 = vmul.f32 %v135, %v149
    %v152 = vld [vmem:[%s4] sm:$0x1]
    %v154 = vlaneseq
    %v155 = vshrl.u32 %v154, 7
    %v156 = vsub.s32 0, %v155
    %v157 = vrot.slane %v152, %v156
    %v159 = vmul.f32 %v150, %v157
    %v160 = vmul.f32 %v151, %v157
    %v161 = vld [vmem:[%s5] sm:$0x1]
    %v163 = vlaneseq
    %v164 = vshrl.u32 %v163, 7
    %v165 = vsub.s32 0, %v164
    %v166 = vrot.slane %v161, %v165
    %v168 = vadd.f32 %v159, %v166
    %v169 = vadd.f32 %v160, %v166
    %v170 = vpack.c.bf16 %v169, %v168
    %v172 = vunpack.c.l.b16 %v170
    %v173 = vunpack.c.h.b16 %v170
    %v174 = vpack.c.b16 %v172, %v172
    %v175 = vpack.c.b16 %v173, %v173
    %vm178 = vcmask 257024
    %179 = vst.msk [vmem:[%s6] sm:$0xf] %vm178, %v174
    %180 = vst.msk [vmem:[%s6 + $0x4] sm:$0xf] %vm178, %v175
  $region33: #{bert_classifier_forward.15} parent=0 // pred_fallthru
    _
  // Predicated region
  $region34: #{bert_classifier_forward.15} parent=0 // pred_check
    _
  $region35: #{bert_classifier_forward.15} parent=0 // pred_check_branch
    %182 = sbr.rel (0) target = $region37
  $region36: #{bert_classifier_forward.15} parent=0 // pred_region
    _
  $region37: #{bert_classifier_forward.15} parent=0 // pred_fallthru
    _
  // Predicated region
  $region38: #{bert_classifier_forward.15} parent=0 // pred_check
    _
  $region39: #{bert_classifier_forward.15} parent=0 // pred_check_branch
    %184 = sbr.rel (0) target = $region41
  $region40: #{bert_classifier_forward.15} parent=0 // pred_region
    _
  $region41: #{bert_classifier_forward.15} parent=0 // pred_fallthru
    _

// kernel: bert_classifier_forward.14
$region0: #{bert_classifier_forward.14}
  #allocation0 [shape = 'u32[]', space=smem, size = 0x4, offset = 0x4, fixed_abs, tag = 'smem constant byte address 0x4 - core index']
  #allocation1 [shape = 'u32[144,128]{1,0:T(1,128)}', space=vmem, size = 0x12000, scoped, tag = 'internal scratch']
  %s0 = inlined_call_operand.vmem [shape: bf16[2,8,96], index: 0, kind: input, shape index: {}]
  %s1 = inlined_call_operand.vmem [shape: f32[2,1,8], index: 1, kind: input, shape index: {}]
  %s2 = inlined_call_operand.vmem [shape: bf16[2,8,32], index: 2, kind: output, shape index: {}]
  %s3 = sld [smem:[#allocation0]]
  $region41: #{bert_classifier_forward.14} parent=0
    _
  %s5 = ssub.s32 1, %s3
  %s6 = scalar_select 0, %s5, %s3
  loop: start=0, step=1, limit=4
  $region2: #{bert_classifier_forward.14} parent=0 // loop_pre_header
    _
  $region3: #{bert_classifier_forward.14} parent=0 // loop_header
    %s8 = sphi 0, %s12
    %p9 = scmp.ge.s32.totalorder %s8, 4
    %s18 = sphi 0, %s20
    %s21 = sphi 0, %s18
    %s22 = sphi 0, %s21
    %s38 = sphi 0, %s22
    %s44 = sphi 0, %s46
    %s47 = sphi 0, %s44
    %s48 = sphi 0, %s47
    %s64 = sphi 0, %s48
    %s70 = sphi 0, %s72
    %s73 = sphi 0, %s70
    %s74 = sphi 0, %s73
    %s90 = sphi 0, %s74
  $region4: #{bert_classifier_forward.14} parent=0 // loop_header_branch
    %11 = sbr.rel (%p9) target = $region8
  $region5: #{bert_classifier_forward.14} parent=0 // loop_body
    %s13 = ssub.s32 %s8, 1
    %s14 = ssub.s32 %s8, 2
    %s15 = sadd.s32 %s8, 1
    %s16 = ssub.s32 %s8, %s15
    %p17 = scmp.eq.s32.totalorder %s16, 0
    %s19 = sadd.s32 %s18, 1
    %s20 = scalar_select %p17, %s18, %s19
    %p23 = pneg %p17
    %p24 = scmp.eq.s32.totalorder %s8, 1
    %p25 = por %p23, %p24
    %p26 = scmp.ne.s32.totalorder %s18, %s21
    %p27 = scmp.eq.s32.totalorder %s8, 0
    %p28 = por %p26, %p27
    %p29 = scmp.ne.s32.totalorder %s18, %s21
    %p30 = scmp.eq.s32.totalorder %s13, 1
    %p31 = por %p29, %p30
    %p32 = scmp.ne.s32.totalorder %s21, %s22
    %p33 = scmp.eq.s32.totalorder %s13, 0
    %p34 = por %p32, %p33
    %p35 = scmp.ne.s32.totalorder %s21, %s22
    %p36 = scmp.eq.s32.totalorder %s14, 1
    %p37 = por %p35, %p36
    %p39 = scmp.ne.s32.totalorder %s22, %s38
    %p40 = scmp.eq.s32.totalorder %s14, 0
    %p41 = por %p39, %p40
    %s42 = ssub.s32 %s8, %s15
    %p43 = scmp.eq.s32.totalorder %s42, 0
    %s45 = sadd.s32 %s44, 1
    %s46 = scalar_select %p43, %s44, %s45
    %p49 = pneg %p43
    %p50 = scmp.eq.s32.totalorder %s8, 1
    %p51 = por %p49, %p50
    %p52 = scmp.ne.s32.totalorder %s44, %s47
    %p53 = scmp.eq.s32.totalorder %s8, 0
    %p54 = por %p52, %p53
    %p55 = scmp.ne.s32.totalorder %s44, %s47
    %p56 = scmp.eq.s32.totalorder %s13, 1
    %p57 = por %p55, %p56
    %p58 = scmp.ne.s32.totalorder %s47, %s48
    %p59 = scmp.eq.s32.totalorder %s13, 0
    %p60 = por %p58, %p59
    %p61 = scmp.ne.s32.totalorder %s47, %s48
    %p62 = scmp.eq.s32.totalorder %s14, 1
    %p63 = por %p61, %p62
    %p65 = scmp.ne.s32.totalorder %s48, %s64
    %p66 = scmp.eq.s32.totalorder %s14, 0
    %p67 = por %p65, %p66
    %s68 = ssub.s32 %s8, %s15
    %p69 = scmp.eq.s32.totalorder %s68, 0
    %s71 = sadd.s32 %s70, 1
    %s72 = scalar_select %p69, %s70, %s71
    %p75 = pneg %p69
    %p76 = scmp.eq.s32.totalorder %s8, 1
    %p77 = por %p75, %p76
    %p78 = scmp.ne.s32.totalorder %s70, %s73
    %p79 = scmp.eq.s32.totalorder %s8, 0
    %p80 = por %p78, %p79
    %p81 = scmp.ne.s32.totalorder %s70, %s73
    %p82 = scmp.eq.s32.totalorder %s13, 1
    %p83 = por %p81, %p82
    %p84 = scmp.ne.s32.totalorder %s73, %s74
    %p85 = scmp.eq.s32.totalorder %s13, 0
    %p86 = por %p84, %p85
    %p87 = scmp.ne.s32.totalorder %s73, %s74
    %p88 = scmp.eq.s32.totalorder %s14, 1
    %p89 = por %p87, %p88
    %p91 = scmp.ne.s32.totalorder %s74, %s90
    %p92 = scmp.eq.s32.totalorder %s14, 0
    %p93 = por %p91, %p92
    %p94 = scmp.le.s32.totalorder 1, %s8
    %p95 = scmp.lt.s32.totalorder %s8, 3
    %p96 = pnand %p94, %p95
    %p97 = pneg %p96
    // Predicated region
    $region9: #{bert_classifier_forward.14} parent=5 // pred_check
      _
    $region10: #{bert_classifier_forward.14} parent=5 // pred_check_branch
      %99 = sbr.rel (%p96) target = $region12
    $region11: #{bert_classifier_forward.14} parent=5 // pred_region
      %s100 = ssub.s32 %s8, 1
    $region12: #{bert_classifier_forward.14} parent=5 // pred_fallthru
      _
    %p101 = scmp.lt.s32.totalorder %s8, 2
    // Predicated region
    $region13: #{bert_classifier_forward.14} parent=5 // pred_check
      %p102 = pneg %p101
    $region14: #{bert_classifier_forward.14} parent=5 // pred_check_branch
      %104 = sbr.rel (%p102) target = $region16
    $region15: #{bert_classifier_forward.14} parent=5 // pred_region
      // Predicated region
      $region17: #{bert_classifier_forward.14} parent=15 // pred_check
        %p105 = pneg %p28
      $region18: #{bert_classifier_forward.14} parent=15 // pred_check_branch
        %107 = sbr.rel (%p105) target = $region20
      $region19: #{bert_classifier_forward.14} parent=15 // pred_region
        %p108 = scmp.lt.s32.totalorder %s8, 1
        %s109 = scalar_select %p108, %s8, 1
        %s110 = smul.addr %s109, 4
        %s111 = scalar_lea.vmem %s0, %s110
      $region20: #{bert_classifier_forward.14} parent=15 // pred_fallthru
        _
      // Predicated region
      $region21: #{bert_classifier_forward.14} parent=15 // pred_check
        %p112 = pneg %p54
      $region22: #{bert_classifier_forward.14} parent=15 // pred_check_branch
        %114 = sbr.rel (%p112) target = $region24
      $region23: #{bert_classifier_forward.14} parent=15 // pred_region
        %p115 = scmp.lt.s32.totalorder %s8, 1
        %s116 = scalar_select %p115, %s8, 1
        %s117 = scalar_lea.vmem %s1, %s116
      $region24: #{bert_classifier_forward.14} parent=15 // pred_fallthru
        _
    $region16: #{bert_classifier_forward.14} parent=5 // pred_fallthru
      _
    %p118 = scmp.le.s32.totalorder 1, %s8
    %p119 = scmp.lt.s32.totalorder %s8, 3
    %p120 = pnand %p118, %p119
    %p121 = pneg %p120
    // Predicated region
    $region25: #{bert_classifier_forward.14} parent=5 // pred_check
      _
    $region26: #{bert_classifier_forward.14} parent=5 // pred_check_branch
      %123 = sbr.rel (%p120) target = $region28
    $region27: #{bert_classifier_forward.14} parent=5 // pred_region
      %s124 = ssub.s32 %s8, 1
      %p125 = scmp.lt.s32.totalorder %s13, 1
      %s126 = scalar_select %p125, %s13, 1
      %s127 = smul.addr %s126, 4
      %s128 = scalar_lea.vmem %s0, %s127
      %p129 = pneg %p34
      %p130 = pneg %p31
      %p131 = scmp.lt.s32.totalorder %s13, 1
      %s132 = scalar_select %p131, %s13, 1
      %s133 = scalar_lea.vmem %s1, %s132
      %p134 = pneg %p60
      %p135 = pneg %p57
      %p136 = pneg %p86
      %p137 = pneg %p83
      %p138 = scmp.lt.s32.totalorder %s13, 1
      %s139 = scalar_select %p138, %s13, 1
      %s140 = smul.addr %s139, 4
      %s141 = scalar_lea.vmem %s2, %s140
      %p142 = scmp.lt.s32.totalorder %s13, 1
      %s143 = scalar_select %p142, %s13, 1
      %s144 = smul.addr %s143, 4
      %s145 = scalar_lea.vmem %s0, %s144
      %p146 = scmp.lt.s32.totalorder %s13, 1
      %s147 = scalar_select %p146, %s13, 1
      %s148 = scalar_lea.vmem %s1, %s147
      %p149 = scmp.lt.s32.totalorder %s13, 1
      %s150 = scalar_select %p149, %s13, 1
      %s151 = smul.addr %s150, 4
      %s152 = scalar_lea.vmem %s2, %s151
      %v154 = vld [vmem:[%s145] sm:$0xf]
      %v155 = vld [vmem:[%s148] sm:$0x1]
      %v157 = vunpack.c.l.b16 %v154
      %v158 = vpack.c.b16 %v157, %v157
      %159 = vrot.lane.b32.xlu0 %v158, 96
      %v160 = vpop.permute.xlu0 %159
      %vm161 = vcmask 130048
      %v163 = vsel %vm161, %v154, 0
      %v166 = vsel %vm161, %v160, 0
      %168 = vmatprep.subr.bf16.mxu0 0
      %169 = vmatpush1.bf16.xpose.msra.mxu0 0
      %170 = vmatprep.subr.bf16.mxu0 0
      %171 = vmatpush1.bf16.xpose.msra.mxu0 0
      %172 = vmatprep.subr.bf16.mxu0 0
      %173 = vmatpush1.bf16.xpose.msra.mxu0 0
      %174 = vmatprep.subr.bf16.mxu0 0
      %175 = vmatpush1.bf16.xpose.msra.mxu0 0
      %176 = vmatprep.subr.bf16.mxu0 0
      %177 = vmatpush1.bf16.xpose.msra.mxu0 0
      %178 = vmatprep.subr.bf16.mxu0 0
      %179 = vmatpush1.bf16.xpose.msra.mxu0 0
      %180 = vmatprep.subr.bf16.mxu0 0
      %181 = vmatpush1.bf16.xpose.msra.mxu0 0
      %182 = vmatprep.subr.bf16.mxu0 0
      %183 = vmatpush1.bf16.xpose.msra.mxu0 %v166
      %184 = vmatprep.subr.bf16.mxu0 0
      %185 = vmatpush2.bf16.xpose.msra.mxu0 0
      %186 = vmatprep.subr.bf16.mxu0 0
      %187 = vmatpush2.bf16.xpose.msra.mxu0 0
      %188 = vmatprep.subr.bf16.mxu0 0
      %189 = vmatpush2.bf16.xpose.msra.mxu0 0
      %190 = vmatprep.subr.bf16.mxu0 0
      %191 = vmatpush2.bf16.xpose.msra.mxu0 0
      %192 = vmatprep.subr.bf16.mxu0 0
      %193 = vmatpush2.bf16.xpose.msra.mxu0 0
      %194 = vmatprep.subr.bf16.mxu0 0
      %195 = vmatpush2.bf16.xpose.msra.mxu0 0
      %196 = vmatprep.subr.bf16.mxu0 0
      %197 = vmatpush2.bf16.xpose.msra.mxu0 0
      %198 = vmatprep.subr.bf16.mxu0 0
      %199 = vmatpush2.bf16.xpose.msra.mxu0 0
      %200 = vmatprep.mubr.bf16.mxu0 0
      %201 = vmatmul.mubr.bf16.gmra.mxu0 %v163
      %v202 = vpop.f32.mrf.mxu0
      %v203 = vadd.f32 0.0, %v202
      %v204 = vpop.f32.mrf.mxu0
      %v205 = vpop.f32.mrf.mxu0
      %v206 = vpop.f32.mrf.mxu0
      %207 = vdwg.mxu0
      %v208 = vmul.f32 %v203, 0.25
      %v210 = vlaneseq
      %v211 = vshrl.u32 %v210, 7
      %v212 = vsub.s32 0, %v211
      %v213 = vrot.slane %v155, %v212
      %v215 = vadd.f32 %v208, %v213
      %vm216 = vcmask 64512
      %v217 = vsel %vm216, %v215, -inf
      %218 = vmax.xlane.f32.xlu0 %v217
      %v219 = vpop.xlane.xlu0 %218
      %v220 = vsub.f32 %v215, %v219
      %v221 = vmul.f32 %v220, 1.442695
      %v222 = vpow.pop %v221
      %v223 = vsel %vm216, %v222, 0.0
      %224 = vadd.xlane.f32.xlu0 %v223
      %v225 = vpop.xlane.xlu0 %224
      %v226 = vrcp.pop %v225
      %v227 = vmul.f32 %v222, %v226
      %v228 = vpack.c.bf16 %v227, %v227
      %229 = vrot.lane.b32.xlu0 %v158, 64
      %v230 = vpop.permute.xlu0 %229
      %v232 = vsel %vm216, %v228, 0
      %vm234 = vcmask 1043456
      %v236 = vsel %vm234, %v230, 0
      %238 = vmatprep.subr.bf16.mxu0 0
      %239 = vmatpush1.bf16.msra.mxu0 0
      %240 = vmatprep.subr.bf16.mxu0 0
      %241 = vmatpush1.bf16.msra.mxu0 0
      %242 = vmatprep.subr.bf16.mxu0 0
      %243 = vmatpush1.bf16.msra.mxu0 0
      %244 = vmatprep.subr.bf16.mxu0 0
      %245 = vmatpush1.bf16.msra.mxu0 0
      %246 = vmatprep.subr.bf16.mxu0 0
      %247 = vmatpush1.bf16.msra.mxu0 0
      %248 = vmatprep.subr.bf16.mxu0 0
      %249 = vmatpush1.bf16.msra.mxu0 0
      %250 = vmatprep.subr.bf16.mxu0 0
      %251 = vmatpush1.bf16.msra.mxu0 0
      %252 = vmatprep.subr.bf16.mxu0 0
      %253 = vmatpush1.bf16.msra.mxu0 %v236
      %254 = vmatprep.subr.bf16.mxu0 0
      %255 = vmatpush2.bf16.msra.mxu0 0
      %256 = vmatprep.subr.bf16.mxu0 0
      %257 = vmatpush2.bf16.msra.mxu0 0
      %258 = vmatprep.subr.bf16.mxu0 0
      %259 = vmatpush2.bf16.msra.mxu0 0
      %260 = vmatprep.subr.bf16.mxu0 0
      %261 = vmatpush2.bf16.msra.mxu0 0
      %262 = vmatprep.subr.bf16.mxu0 0
      %263 = vmatpush2.bf16.msra.mxu0 0
      %264 = vmatprep.subr.bf16.mxu0 0
      %265 = vmatpush2.bf16.msra.mxu0 0
      %266 = vmatprep.subr.bf16.mxu0 0
      %267 = vmatpush2.bf16.msra.mxu0 0
      %268 = vmatprep.subr.bf16.mxu0 0
      %269 = vmatpush2.bf16.msra.mxu0 0
      %270 = vmatprep.mubr.bf16.mxu0 0
      %271 = vmatmul.mubr.bf16.gmra.mxu0 %v232
      %v272 = vpop.f32.mrf.mxu0
      %v273 = vadd.f32 0.0, %v272
      %v274 = vpop.f32.mrf.mxu0
      %v275 = vpop.f32.mrf.mxu0
      %v276 = vpop.f32.mrf.mxu0
      %277 = vdwg.mxu0
      %278 = vrot.lane.b32.xlu0 %v158, 112
      %v279 = vpop.permute.xlu0 %278
      %280 = vrot.lane.b32.xlu0 %v158, 80
      %v281 = vpop.permute.xlu0 %280
      %v283 = vsel %vm161, %v279, 0
      %v286 = vsel %vm161, %v281, 0
      %288 = vmatprep.subr.bf16.mxu0 0
      %289 = vmatpush1.bf16.xpose.msra.mxu0 0
      %290 = vmatprep.subr.bf16.mxu0 0
      %291 = vmatpush1.bf16.xpose.msra.mxu0 0
      %292 = vmatprep.subr.bf16.mxu0 0
      %293 = vmatpush1.bf16.xpose.msra.mxu0 0
      %294 = vmatprep.subr.bf16.mxu0 0
      %295 = vmatpush1.bf16.xpose.msra.mxu0 0
      %296 = vmatprep.subr.bf16.mxu0 0
      %297 = vmatpush1.bf16.xpose.msra.mxu0 0
      %298 = vmatprep.subr.bf16.mxu0 0
      %299 = vmatpush1.bf16.xpose.msra.mxu0 0
      %300 = vmatprep.subr.bf16.mxu0 0
      %301 = vmatpush1.bf16.xpose.msra.mxu0 0
      %302 = vmatprep.subr.bf16.mxu0 0
      %303 = vmatpush1.bf16.xpose.msra.mxu0 %v286
      %304 = vmatprep.subr.bf16.mxu0 0
      %305 = vmatpush2.bf16.xpose.msra.mxu0 0
      %306 = vmatprep.subr.bf16.mxu0 0
      %307 = vmatpush2.bf16.xpose.msra.mxu0 0
      %308 = vmatprep.subr.bf16.mxu0 0
      %309 = vmatpush2.bf16.xpose.msra.mxu0 0
      %310 = vmatprep.subr.bf16.mxu0 0
      %311 = vmatpush2.bf16.xpose.msra.mxu0 0
      %312 = vmatprep.subr.bf16.mxu0 0
      %313 = vmatpush2.bf16.xpose.msra.mxu0 0
      %314 = vmatprep.subr.bf16.mxu0 0
      %315 = vmatpush2.bf16.xpose.msra.mxu0 0
      %316 = vmatprep.subr.bf16.mxu0 0
      %317 = vmatpush2.bf16.xpose.msra.mxu0 0
      %318 = vmatprep.subr.bf16.mxu0 0
      %319 = vmatpush2.bf16.xpose.msra.mxu0 0
      %320 = vmatprep.mubr.bf16.mxu0 0
      %321 = vmatmul.mubr.bf16.gmra.mxu0 %v283
      %v322 = vpop.f32.mrf.mxu0
      %v323 = vadd.f32 0.0, %v322
      %v324 = vpop.f32.mrf.mxu0
      %v325 = vpop.f32.mrf.mxu0
      %v326 = vpop.f32.mrf.mxu0
      %327 = vdwg.mxu0
      %v328 = vmul.f32 %v323, 0.25
      %v329 = vadd.f32 %v328, %v213
      %v330 = vsel %vm216, %v329, -inf
      %331 = vmax.xlane.f32.xlu0 %v330
      %v332 = vpop.xlane.xlu0 %331
      %v333 = vsub.f32 %v329, %v332
      %v334 = vmul.f32 %v333, 1.442695
      %v335 = vpow.pop %v334
      %v336 = vsel %vm216, %v335, 0.0
      %337 = vadd.xlane.f32.xlu0 %v336
      %v338 = vpop.xlane.xlu0 %337
      %v339 = vrcp.pop %v338
      %v340 = vmul.f32 %v335, %v339
      %v341 = vpack.c.bf16 %v340, %v340
      %342 = vrot.lane.b32.xlu0 %v158, 48
      %v343 = vpop.permute.xlu0 %342
      %v345 = vsel %vm216, %v341, 0
      %v348 = vsel %vm234, %v343, 0
      %350 = vmatprep.subr.bf16.mxu0 0
      %351 = vmatpush1.bf16.msra.mxu0 0
      %352 = vmatprep.subr.bf16.mxu0 0
      %353 = vmatpush1.bf16.msra.mxu0 0
      %354 = vmatprep.subr.bf16.mxu0 0
      %355 = vmatpush1.bf16.msra.mxu0 0
      %356 = vmatprep.subr.bf16.mxu0 0
      %357 = vmatpush1.bf16.msra.mxu0 0
      %358 = vmatprep.subr.bf16.mxu0 0
      %359 = vmatpush1.bf16.msra.mxu0 0
      %360 = vmatprep.subr.bf16.mxu0 0
      %361 = vmatpush1.bf16.msra.mxu0 0
      %362 = vmatprep.subr.bf16.mxu0 0
      %363 = vmatpush1.bf16.msra.mxu0 0
      %364 = vmatprep.subr.bf16.mxu0 0
      %365 = vmatpush1.bf16.msra.mxu0 %v348
      %366 = vmatprep.subr.bf16.mxu0 0
      %367 = vmatpush2.bf16.msra.mxu0 0
      %368 = vmatprep.subr.bf16.mxu0 0
      %369 = vmatpush2.bf16.msra.mxu0 0
      %370 = vmatprep.subr.bf16.mxu0 0
      %371 = vmatpush2.bf16.msra.mxu0 0
      %372 = vmatprep.subr.bf16.mxu0 0
      %373 = vmatpush2.bf16.msra.mxu0 0
      %374 = vmatprep.subr.bf16.mxu0 0
      %375 = vmatpush2.bf16.msra.mxu0 0
      %376 = vmatprep.subr.bf16.mxu0 0
      %377 = vmatpush2.bf16.msra.mxu0 0
      %378 = vmatprep.subr.bf16.mxu0 0
      %379 = vmatpush2.bf16.msra.mxu0 0
      %380 = vmatprep.subr.bf16.mxu0 0
      %381 = vmatpush2.bf16.msra.mxu0 0
      %382 = vmatprep.mubr.bf16.mxu0 0
      %383 = vmatmul.mubr.bf16.gmra.mxu0 %v345
      %v384 = vpop.f32.mrf.mxu0
      %v385 = vadd.f32 0.0, %v384
      %v386 = vpop.f32.mrf.mxu0
      %v387 = vpop.f32.mrf.mxu0
      %v388 = vpop.f32.mrf.mxu0
      %389 = vdwg.mxu0
      %391 = vrot.lane.b32.xlu0 %v385, 16
      %v392 = vpop.permute.xlu0 %391
      %v394 = vsel %vm161, %v273, %v392
      %v395 = vpack.c.bf16 %v394, %v394
      %vm396 = vcmask 257024
      %397 = vst.msk [vmem:[%s152] sm:$0xf] %vm396, %v395
      %p398 = scmp.lt.s32.totalorder %s13, 1
      %s399 = scalar_select %p398, %s13, 1
      %s400 = smul.addr %s399, 4
      %s401 = scalar_lea.vmem %s2, %s400
      // Predicated region
      $region29: #{bert_classifier_forward.14} parent=27 // pred_check
        %p402 = pneg %p83
      $region30: #{bert_classifier_forward.14} parent=27 // pred_check_branch
        %404 = sbr.rel (%p402) target = $region32
      $region31: #{bert_classifier_forward.14} parent=27 // pred_region
        _
      $region32: #{bert_classifier_forward.14} parent=27 // pred_fallthru
        _
    $region28: #{bert_classifier_forward.14} parent=5 // pred_fallthru
      _
    %p405 = scmp.le.s32.totalorder 2, %s8
    // Predicated region
    $region33: #{bert_classifier_forward.14} parent=5 // pred_check
      %p406 = pneg %p405
    $region34: #{bert_classifier_forward.14} parent=5 // pred_check_branch
      %408 = sbr.rel (%p406) target = $region36
    $region35: #{bert_classifier_forward.14} parent=5 // pred_region
      %s409 = ssub.s32 %s8, 2
      // Predicated region
      $region37: #{bert_classifier_forward.14} parent=35 // pred_check
        %p410 = pneg %p89
      $region38: #{bert_classifier_forward.14} parent=35 // pred_check_branch
        %412 = sbr.rel (%p410) target = $region40
      $region39: #{bert_classifier_forward.14} parent=35 // pred_region
        %p413 = scmp.lt.s32.totalorder %s14, 1
        %s414 = scalar_select %p413, %s14, 1
        %s415 = smul.addr %s414, 4
        %s416 = scalar_lea.vmem %s2, %s415
      $region40: #{bert_classifier_forward.14} parent=35 // pred_fallthru
        _
    $region36: #{bert_classifier_forward.14} parent=5 // pred_fallthru
      _
  $region6: #{bert_classifier_forward.14} parent=0 // loop_footer
    %s12 = sadd.s32 1, %s8
  $region7: #{bert_classifier_forward.14} parent=0 // loop_footer_branch
    %7 = sbr.rel target = $region3
  $region8: #{bert_classifier_forward.14} parent=0 // loop_exit
    _

// kernel: bert_classifier_forward.16
$region0: #{bert_classifier_forward.16}
  #allocation0 [shape = 'u32[]', space=smem, size = 0x4, offset = 0x4, fixed_abs, tag = 'smem constant byte address 0x4 - core index']
  #allocation1 [shape = 'u32[144,128]{1,0:T(1,128)}', space=vmem, size = 0x12000, scoped, tag = 'internal scratch']
  #allocation2 [shape = 'f32[16,64]{1,0:T(8,128)}', space=vmem, size = 0x2000, scoped, tag = 'scratch operand']
  %s0 = inlined_call_operand.vmem [shape: bf16[16,32], index: 0, kind: input, shape index: {}]
  %s1 = inlined_call_operand.vmem [shape: bf16[32,64], index: 1, kind: input, shape index: {}]
  %s2 = inlined_call_operand.vmem [shape: f32[1,64], index: 2, kind: input, shape index: {}]
  %s3 = inlined_call_operand.vmem [shape: bf16[16,64], index: 3, kind: output, shape index: {}]
  %s4 = sld [smem:[#allocation0]]
  $region30: #{bert_classifier_forward.16} parent=0
    _
  %s6 = ssub.s32 1, %s4
  %s7 = scalar_select 0, %s6, %s4
  // Predicated region
  $region2: #{bert_classifier_forward.16} parent=0 // pred_check
    _
  $region3: #{bert_classifier_forward.16} parent=0 // pred_check_branch
    %9 = sbr.rel (0) target = $region5
  $region4: #{bert_classifier_forward.16} parent=0 // pred_region
    _
  $region5: #{bert_classifier_forward.16} parent=0 // pred_fallthru
    _
  // Predicated region
  $region6: #{bert_classifier_forward.16} parent=0 // pred_check
    _
  $region7: #{bert_classifier_forward.16} parent=0 // pred_check_branch
    %11 = sbr.rel (0) target = $region9
  $region8: #{bert_classifier_forward.16} parent=0 // pred_region
    _
  $region9: #{bert_classifier_forward.16} parent=0 // pred_fallthru
    _
  // Predicated region
  $region10: #{bert_classifier_forward.16} parent=0 // pred_check
    _
  $region11: #{bert_classifier_forward.16} parent=0 // pred_check_branch
    %13 = sbr.rel (0) target = $region13
  $region12: #{bert_classifier_forward.16} parent=0 // pred_region
    _
  $region13: #{bert_classifier_forward.16} parent=0 // pred_fallthru
    _
  %p15 = scmp.eq.s32.totalorder 0, 0
  // Predicated region
  $region14: #{bert_classifier_forward.16} parent=0 // pred_check
    %p16 = pneg %p15
  $region15: #{bert_classifier_forward.16} parent=0 // pred_check_branch
    %18 = sbr.rel (%p16) target = $region17
  $region16: #{bert_classifier_forward.16} parent=0 // pred_region
    %vm19 = vcmask 523264
    %20 = vst.msk [vmem:[#allocation2] sm:$0xff] %vm19, 0.0
    %21 = vst.msk [vmem:[#allocation2 + $0x8] sm:$0xff] %vm19, 0.0
  $region17: #{bert_classifier_forward.16} parent=0 // pred_fallthru
    _
  %v22 = vld [vmem:[#allocation2] sm:$0xff]
  %v23 = vld [vmem:[#allocation2 + $0x8] sm:$0xff]
  %v24 = vld [vmem:[%s0] sm:$0xf]
  %v25 = vld [vmem:[%s0 + $0x4] sm:$0xf]
  %v26 = vld [vmem:[%s1] sm:$0xf]
  %v27 = vld [vmem:[%s1 + $0x4] sm:$0xf]
  %v28 = vld [vmem:[%s1 + $0x8] sm:$0xf]
  %v29 = vld [vmem:[%s1 + $0xc] sm:$0xf]
  %v32 = vunpack.c.l.b16 %v24
  %v33 = vunpack.c.l.b16 %v25
  %v34 = vpack.c.b16 %v33, %v32
  %v39 = vunpack.c.l.b16 %v26
  %v40 = vunpack.c.l.b16 %v27
  %v41 = vunpack.c.l.b16 %v28
  %v42 = vunpack.c.l.b16 %v29
  %v43 = vpack.c.b16 %v40, %v39
  %v44 = vpack.c.b16 %v42, %v41
  %vm47 = vcmask 261120
  %v49 = vsel %vm47, %v34, 0
  %51 = vmatprep.subr.bf16.mxu0 0
  %52 = vmatpush1.bf16.msra.mxu0 0
  %53 = vmatprep.subr.bf16.mxu0 0
  %54 = vmatpush1.bf16.msra.mxu0 0
  %55 = vmatprep.subr.bf16.mxu0 0
  %56 = vmatpush1.bf16.msra.mxu0 0
  %57 = vmatprep.subr.bf16.mxu0 0
  %58 = vmatpush1.bf16.msra.mxu0 0
  %59 = vmatprep.subr.bf16.mxu0 0
  %60 = vmatpush1.bf16.msra.mxu0 0
  %61 = vmatprep.subr.bf16.mxu0 0
  %62 = vmatpush1.bf16.msra.mxu0 0
  %63 = vmatprep.subr.bf16.mxu0 0
  %64 = vmatpush1.bf16.msra.mxu0 %v44
  %65 = vmatprep.subr.bf16.mxu0 0
  %66 = vmatpush1.bf16.msra.mxu0 %v43
  %67 = vmatprep.subr.bf16.mxu0 0
  %68 = vmatpush2.bf16.msra.mxu0 0
  %69 = vmatprep.subr.bf16.mxu0 0
  %70 = vmatpush2.bf16.msra.mxu0 0
  %71 = vmatprep.subr.bf16.mxu0 0
  %72 = vmatpush2.bf16.msra.mxu0 0
  %73 = vmatprep.subr.bf16.mxu0 0
  %74 = vmatpush2.bf16.msra.mxu0 0
  %75 = vmatprep.subr.bf16.mxu0 0
  %76 = vmatpush2.bf16.msra.mxu0 0
  %77 = vmatprep.subr.bf16.mxu0 0
  %78 = vmatpush2.bf16.msra.mxu0 0
  %79 = vmatprep.subr.bf16.mxu0 0
  %80 = vmatpush2.bf16.msra.mxu0 0
  %81 = vmatprep.subr.bf16.mxu0 0
  %82 = vmatpush2.bf16.msra.mxu0 0
  %83 = vmatprep.mubr.bf16.mxu0 0
  %84 = vmatmul.mubr.bf16.gmra.mxu0 %v49
  %v85 = vpop.f32.mrf.mxu0
  %v86 = vadd.f32 0.0, %v85
  %v87 = vpop.f32.mrf.mxu0
  %v88 = vpop.f32.mrf.mxu0
  %v89 = vadd.f32 0.0, %v88
  %v90 = vpop.f32.mrf.mxu0
  %91 = vdwg.mxu0
  %v92 = vadd.f32 %v22, %v86
  %v93 = vadd.f32 %v23, %v89
  %vm94 = vcmask 523264
  %95 = vst.msk [vmem:[#allocation2] sm:$0xff] %vm94, %v92
  %96 = vst.msk [vmem:[#allocation2 + $0x8] sm:$0xff] %vm94, %v93
  // Predicated region
  $region18: #{bert_classifier_forward.16} parent=0 // pred_check
    %p97 = pneg %p15
  $region19: #{bert_classifier_forward.16} parent=0 // pred_check_branch
    %99 = sbr.rel (%p97) target = $region21
  $region20: #{bert_classifier_forward.16} parent=0 // pred_region
    %v100 = vld [vmem:[#allocation2] sm:$0xff]
    %v101 = vld [vmem:[#allocation2 + $0x8] sm:$0xff]
    %v102 = vld [vmem:[%s2] sm:$0x1]
    %v104 = vlaneseq
    %v105 = vshrl.u32 %v104, 7
    %v106 = vsub.s32 0, %v105
    %v107 = vrot.slane %v102, %v106
    %v109 = vadd.f32 %v100, %v107
    %v110 = vadd.f32 %v101, %v107
    %v111 = vmul.f32 %v109, %v109
    %v112 = vmul.f32 %v110, %v110
    %v113 = vmul.f32 %v109, %v111
    %v114 = vmul.f32 %v110, %v112
    %v115 = vmul.f32 %v113, 0.044715
    %v116 = vmul.f32 %v114, 0.044715
    %v117 = vadd.f32 %v109, %v115
    %v118 = vadd.f32 %v110, %v116
    %v119 = vmul.f32 %v117, 0.7978846
    %v120 = vmul.f32 %v118, 0.7978846
    %v121 = vtanh.pop %v119
    %v122 = vtanh.pop %v120
    %v123 = vadd.f32 %v121, 1.0
    %v124 = vadd.f32 %v122, 1.0
    %v125 = vmul.f32 %v123, 0.5
    %v126 = vmul.f32 %v124, 0.5
    %v127 = vmul.f32 %v109, %v125
    %v128 = vmul.f32 %v110, %v126
    %v129 = vpack.c.bf16 %v128, %v127
    %v131 = vunpack.c.l.b16 %v129
    %v132 = vunpack.c.h.b16 %v129
    %v133 = vpack.c.b16 %v131, %v131
    %v134 = vpack.c.b16 %v132, %v132
    %vm137 = vcmask 519168
    %138 = vst.msk [vmem:[%s3] sm:$0xf] %vm137, %v133
    %139 = vst.msk [vmem:[%s3 + $0x4] sm:$0xf] %vm137, %v134
  $region21: #{bert_classifier_forward.16} parent=0 // pred_fallthru
    _
  // Predicated region
  $region22: #{bert_classifier_forward.16} parent=0 // pred_check
    _
  $region23: #{bert_classifier_forward.16} parent=0 // pred_check_branch
    %141 = sbr.rel (0) target = $region25
  $region24: #{bert_classifier_forward.16} parent=0 // pred_region
    _
  $region25: #{bert_classifier_forward.16} parent=0 // pred_fallthru
    _
  // Predicated region
  $region26: #{bert_classifier_forward.16} parent=0 // pred_check
    _
  $region27: #{bert_classifier_forward.16} parent=0 // pred_check_branch
    %143 = sbr.rel (0) target = $region29
  $region28: #{bert_classifier_forward.16} parent=0 // pred_region
    _
  $region29: #{bert_classifier_forward.16} parent=0 // pred_fallthru
    _

// kernel: bert_classifier_forward.23
$region0: #{bert_classifier_forward.23}
  #allocation0 [shape = 'u32[]', space=smem, size = 0x4, offset = 0x4, fixed_abs, tag = 'smem constant byte address 0x4 - core index']
  #allocation1 [shape = 'u32[144,128]{1,0:T(1,128)}', space=vmem, size = 0x12000, scoped, tag = 'internal scratch']
  %s0 = inlined_call_operand.vmem [shape: bf16[2,32], index: 0, kind: input, shape index: {}]
  %s1 = inlined_call_operand.vmem [shape: bf16[32,32], index: 1, kind: input, shape index: {}]
  %s2 = inlined_call_operand.vmem [shape: f32[1,32], index: 2, kind: input, shape index: {}]
  %s3 = inlined_call_operand.vmem [shape: bf16[32,128], index: 3, kind: input, shape index: {}]
  %s4 = inlined_call_operand.vmem [shape: f32[1,128], index: 4, kind: input, shape index: {}]
  %s5 = inlined_call_operand.hbm [shape: f32[2,128], index: 5, kind: output, shape index: {}]
  %s6 = sld [smem:[#allocation0]]
  $region30: #{bert_classifier_forward.23} parent=0
    _
  %s8 = ssub.s32 1, %s6
  %s9 = scalar_select 0, %s8, %s6
  $region1: #{bert_classifier_forward.23} parent=0
    #allocation2 [shape = 'u8[1024]{0}', space=vmem, size = 0x400, scoped, tag = 'output window, operand 0, single buffered']
    #allocation3 [shape = 's32[1]{0}', space=sflag, size = 0x4, scoped, tag = 'scoped memory for bert_classifier_forward.23']
    %10 = vsyncpa [#allocation3], 0
    // Predicated region
    $region2: #{bert_classifier_forward.23} parent=1 // pred_check
      _
    $region3: #{bert_classifier_forward.23} parent=1 // pred_check_branch
      %12 = sbr.rel (0) target = $region5
    $region4: #{bert_classifier_forward.23} parent=1 // pred_region
      _
    $region5: #{bert_classifier_forward.23} parent=1 // pred_fallthru
      _
    // Predicated region
    $region6: #{bert_classifier_forward.23} parent=1 // pred_check
      _
    $region7: #{bert_classifier_forward.23} parent=1 // pred_check_branch
      %14 = sbr.rel (0) target = $region9
    $region8: #{bert_classifier_forward.23} parent=1 // pred_region
      _
    $region9: #{bert_classifier_forward.23} parent=1 // pred_fallthru
      _
    // Predicated region
    $region10: #{bert_classifier_forward.23} parent=1 // pred_check
      _
    $region11: #{bert_classifier_forward.23} parent=1 // pred_check_branch
      %16 = sbr.rel (0) target = $region13
    $region12: #{bert_classifier_forward.23} parent=1 // pred_region
      _
    $region13: #{bert_classifier_forward.23} parent=1 // pred_fallthru
      _
    // Predicated region
    $region14: #{bert_classifier_forward.23} parent=1 // pred_check
      _
    $region15: #{bert_classifier_forward.23} parent=1 // pred_check_branch
      %18 = sbr.rel (0) target = $region17
    $region16: #{bert_classifier_forward.23} parent=1 // pred_region
      _
    $region17: #{bert_classifier_forward.23} parent=1 // pred_fallthru
      _
    // Predicated region
    $region18: #{bert_classifier_forward.23} parent=1 // pred_check
      _
    $region19: #{bert_classifier_forward.23} parent=1 // pred_check_branch
      %20 = sbr.rel (0) target = $region21
    $region20: #{bert_classifier_forward.23} parent=1 // pred_region
      _
    $region21: #{bert_classifier_forward.23} parent=1 // pred_fallthru
      _
    %v22 = vld [vmem:[%s0] sm:$0x1]
    %v23 = vld [vmem:[%s1] sm:$0xf]
    %v24 = vld [vmem:[%s1 + $0x4] sm:$0xf]
    %v25 = vld [vmem:[%s1 + $0x8] sm:$0xf]
    %v26 = vld [vmem:[%s1 + $0xc] sm:$0xf]
    %v27 = vld [vmem:[%s2] sm:$0x1]
    %v29 = vlaneseq
    %v30 = vshrl.u32 %v29, 7
    %v31 = vsub.s32 0, %v30
    %v32 = vrot.slane %v27, %v31
    %v38 = vunpack.c.l.b16 %v23
    %v39 = vunpack.c.l.b16 %v24
    %v40 = vunpack.c.l.b16 %v25
    %v41 = vunpack.c.l.b16 %v26
    %v42 = vpack.c.b16 %v39, %v38
    %v43 = vpack.c.b16 %v41, %v40
    %vm46 = vcmask 261120
    %v48 = vsel %vm46, %v22, 0
    %50 = vmatprep.subr.bf16.mxu0 0
    %51 = vmatpush1.bf16.msra.mxu0 0
    %52 = vmatprep.subr.bf16.mxu0 0
    %53 = vmatpush1.bf16.msra.mxu0 0
    %54 = vmatprep.subr.bf16.mxu0 0
    %55 = vmatpush1.bf16.msra.mxu0 0
    %56 = vmatprep.subr.bf16.mxu0 0
    %57 = vmatpush1.bf16.msra.mxu0 0
    %58 = vmatprep.subr.bf16.mxu0 0
    %59 = vmatpush1.bf16.msra.mxu0 0
    %60 = vmatprep.subr.bf16.mxu0 0
    %61 = vmatpush1.bf16.msra.mxu0 0
    %62 = vmatprep.subr.bf16.mxu0 0
    %63 = vmatpush1.bf16.msra.mxu0 %v43
    %64 = vmatprep.subr.bf16.mxu0 0
    %65 = vmatpush1.bf16.msra.mxu0 %v42
    %66 = vmatprep.subr.bf16.mxu0 0
    %67 = vmatpush2.bf16.msra.mxu0 0
    %68 = vmatprep.subr.bf16.mxu0 0
    %69 = vmatpush2.bf16.msra.mxu0 0
    %70 = vmatprep.subr.bf16.mxu0 0
    %71 = vmatpush2.bf16.msra.mxu0 0
    %72 = vmatprep.subr.bf16.mxu0 0
    %73 = vmatpush2.bf16.msra.mxu0 0
    %74 = vmatprep.subr.bf16.mxu0 0
    %75 = vmatpush2.bf16.msra.mxu0 0
    %76 = vmatprep.subr.bf16.mxu0 0
    %77 = vmatpush2.bf16.msra.mxu0 0
    %78 = vmatprep.subr.bf16.mxu0 0
    %79 = vmatpush2.bf16.msra.mxu0 0
    %80 = vmatprep.subr.bf16.mxu0 0
    %81 = vmatpush2.bf16.msra.mxu0 0
    %82 = vmatprep.mubr.bf16.mxu0 0
    %83 = vmatmul.mubr.bf16.gmra.mxu0 %v48
    %v84 = vpop.f32.mrf.mxu0
    %v85 = vadd.f32 %v32, %v84
    %v86 = vpop.f32.mrf.mxu0
    %v87 = vpop.f32.mrf.mxu0
    %v88 = vpop.f32.mrf.mxu0
    %89 = vdwg.mxu0
    %v90 = vtanh.pop %v85
    %v91 = vpack.c.bf16 %v90, %v90
    %v92 = vld [vmem:[%s3] sm:$0xf]
    %v93 = vld [vmem:[%s3 + $0x4] sm:$0xf]
    %v94 = vld [vmem:[%s3 + $0x8] sm:$0xf]
    %v95 = vld [vmem:[%s3 + $0xc] sm:$0xf]
    %v96 = vld [vmem:[%s4] sm:$0x1]
    %v98 = vlaneseq
    %v99 = vshrl.u32 %v98, 7
    %v100 = vsub.s32 0, %v99
    %v101 = vrot.slane %v96, %v100
    %v107 = vunpack.c.l.b16 %v92
    %v108 = vunpack.c.l.b16 %v93
    %v109 = vunpack.c.l.b16 %v94
    %v110 = vunpack.c.l.b16 %v95
    %v111 = vpack.c.b16 %v108, %v107
    %v112 = vpack.c.b16 %v110, %v109
    %v116 = vsel %vm46, %v91, 0
    %118 = vmatprep.subr.bf16.mxu0 0
    %119 = vmatpush1.bf16.msra.mxu0 0
    %120 = vmatprep.subr.bf16.mxu0 0
    %121 = vmatpush1.bf16.msra.mxu0 0
    %122 = vmatprep.subr.bf16.mxu0 0
    %123 = vmatpush1.bf16.msra.mxu0 0
    %124 = vmatprep.subr.bf16.mxu0 0
    %125 = vmatpush1.bf16.msra.mxu0 0
    %126 = vmatprep.subr.bf16.mxu0 0
    %127 = vmatpush1.bf16.msra.mxu0 0
    %128 = vmatprep.subr.bf16.mxu0 0
    %129 = vmatpush1.bf16.msra.mxu0 0
    %130 = vmatprep.subr.bf16.mxu0 0
    %131 = vmatpush1.bf16.msra.mxu0 %v112
    %132 = vmatprep.subr.bf16.mxu0 0
    %133 = vmatpush1.bf16.msra.mxu0 %v111
    %134 = vmatprep.subr.bf16.mxu0 0
    %135 = vmatpush2.bf16.msra.mxu0 0
    %136 = vmatprep.subr.bf16.mxu0 0
    %137 = vmatpush2.bf16.msra.mxu0 0
    %138 = vmatprep.subr.bf16.mxu0 0
    %139 = vmatpush2.bf16.msra.mxu0 0
    %140 = vmatprep.subr.bf16.mxu0 0
    %141 = vmatpush2.bf16.msra.mxu0 0
    %142 = vmatprep.subr.bf16.mxu0 0
    %143 = vmatpush2.bf16.msra.mxu0 0
    %144 = vmatprep.subr.bf16.mxu0 0
    %145 = vmatpush2.bf16.msra.mxu0 0
    %146 = vmatprep.subr.bf16.mxu0 0
    %147 = vmatpush2.bf16.msra.mxu0 0
    %148 = vmatprep.subr.bf16.mxu0 0
    %149 = vmatpush2.bf16.msra.mxu0 0
    %150 = vmatprep.mubr.bf16.mxu0 0
    %151 = vmatmul.mubr.bf16.gmra.mxu0 %v116
    %v152 = vpop.f32.mrf.mxu0
    %v153 = vadd.f32 %v101, %v152
    %v154 = vpop.f32.mrf.mxu0
    %v155 = vpop.f32.mrf.mxu0
    %v156 = vpop.f32.mrf.mxu0
    %157 = vdwg.mxu0
    %158 = vst [vmem:[#allocation2] sm:$0x3] %v153
    // Predicated region
    $region22: #{bert_classifier_forward.23} parent=1 // pred_check
      _
    $region23: #{bert_classifier_forward.23} parent=1 // pred_check_branch
      %160 = sbr.rel (0) target = $region25
    $region24: #{bert_classifier_forward.23} parent=1 // pred_region
      %s162 = ssub.s32 32, 32
      %163 = vsyncadd [#allocation3], %s162
      %s165 = sshll.u32 [#allocation2], 4
      %s166 = int_to_ptr.vmem [resolvable:$true] %s165
      %168 = dma.vmem_to_hbm [thread:$0]  %s166, 32, %s5, [#allocation3]
    $region25: #{bert_classifier_forward.23} parent=1 // pred_fallthru
      _
    // Predicated region
    $region26: #{bert_classifier_forward.23} parent=1 // pred_check
      _
    $region27: #{bert_classifier_forward.23} parent=1 // pred_check_branch
      %170 = sbr.rel (0) target = $region29
    $region28: #{bert_classifier_forward.23} parent=1 // pred_region
      %171 = dma.done [#allocation3], 32
    $region29: #{bert_classifier_forward.23} parent=1 // pred_fallthru
      _
    %172 = vsyncpa [#allocation3], 1

// kernel: bert_classifier_forward.17
$region0: #{bert_classifier_forward.17}
  #allocation0 [shape = 'u32[]', space=smem, size = 0x4, offset = 0x4, fixed_abs, tag = 'smem constant byte address 0x4 - core index']
  #allocation1 [shape = 'u32[144,128]{1,0:T(1,128)}', space=vmem, size = 0x12000, scoped, tag = 'internal scratch']
  #allocation2 [shape = 'f32[16,32]{1,0:T(8,128)}', space=vmem, size = 0x2000, scoped, tag = 'scratch operand']
  %s0 = inlined_call_operand.vmem [shape: bf16[16,64], index: 0, kind: input, shape index: {}]
  %s1 = inlined_call_operand.vmem [shape: bf16[64,32], index: 1, kind: input, shape index: {}]
  %s2 = inlined_call_operand.vmem [shape: f32[1,32], index: 2, kind: input, shape index: {}]
  %s3 = inlined_call_operand.vmem [shape: bf16[16,32], index: 3, kind: input, shape index: {}]
  %s4 = inlined_call_operand.vmem [shape: f32[1,32], index: 4, kind: input, shape index: {}]
  %s5 = inlined_call_operand.vmem [shape: f32[1,32], index: 5, kind: input, shape index: {}]
  %s6 = inlined_call_operand.vmem [shape: bf16[16,32], index: 6, kind: output, shape index: {}]
  %s7 = sld [smem:[#allocation0]]
  $region42: #{bert_classifier_forward.17} parent=0
    _
  %s9 = ssub.s32 1, %s7
  %s10 = scalar_select 0, %s9, %s7
  // Predicated region
  $region2: #{bert_classifier_forward.17} parent=0 // pred_check
    _
  $region3: #{bert_classifier_forward.17} parent=0 // pred_check_branch
    %12 = sbr.rel (0) target = $region5
  $region4: #{bert_classifier_forward.17} parent=0 // pred_region
    _
  $region5: #{bert_classifier_forward.17} parent=0 // pred_fallthru
    _
  // Predicated region
  $region6: #{bert_classifier_forward.17} parent=0 // pred_check
    _
  $region7: #{bert_classifier_forward.17} parent=0 // pred_check_branch
    %14 = sbr.rel (0) target = $region9
  $region8: #{bert_classifier_forward.17} parent=0 // pred_region
    _
  $region9: #{bert_classifier_forward.17} parent=0 // pred_fallthru
    _
  // Predicated region
  $region10: #{bert_classifier_forward.17} parent=0 // pred_check
    _
  $region11: #{bert_classifier_forward.17} parent=0 // pred_check_branch
    %16 = sbr.rel (0) target = $region13
  $region12: #{bert_classifier_forward.17} parent=0 // pred_region
    _
  $region13: #{bert_classifier_forward.17} parent=0 // pred_fallthru
    _
  // Predicated region
  $region14: #{bert_classifier_forward.17} parent=0 // pred_check
    _
  $region15: #{bert_classifier_forward.17} parent=0 // pred_check_branch
    %18 = sbr.rel (0) target = $region17
  $region16: #{bert_classifier_forward.17} parent=0 // pred_region
    _
  $region17: #{bert_classifier_forward.17} parent=0 // pred_fallthru
    _
  // Predicated region
  $region18: #{bert_classifier_forward.17} parent=0 // pred_check
    _
  $region19: #{bert_classifier_forward.17} parent=0 // pred_check_branch
    %20 = sbr.rel (0) target = $region21
  $region20: #{bert_classifier_forward.17} parent=0 // pred_region
    _
  $region21: #{bert_classifier_forward.17} parent=0 // pred_fallthru
    _
  // Predicated region
  $region22: #{bert_classifier_forward.17} parent=0 // pred_check
    _
  $region23: #{bert_classifier_forward.17} parent=0 // pred_check_branch
    %22 = sbr.rel (0) target = $region25
  $region24: #{bert_classifier_forward.17} parent=0 // pred_region
    _
  $region25: #{bert_classifier_forward.17} parent=0 // pred_fallthru
    _
  %p24 = scmp.eq.s32.totalorder 0, 0
  // Predicated region
  $region26: #{bert_classifier_forward.17} parent=0 // pred_check
    %p25 = pneg %p24
  $region27: #{bert_classifier_forward.17} parent=0 // pred_check_branch
    %27 = sbr.rel (%p25) target = $region29
  $region28: #{bert_classifier_forward.17} parent=0 // pred_region
    %vm28 = vcmask 261120
    %29 = vst.msk [vmem:[#allocation2] sm:$0xff] %vm28, 0.0
    %30 = vst.msk [vmem:[#allocation2 + $0x8] sm:$0xff] %vm28, 0.0
  $region29: #{bert_classifier_forward.17} parent=0 // pred_fallthru
    _
  %v31 = vld [vmem:[#allocation2] sm:$0xff]
  %v32 = vld [vmem:[#allocation2 + $0x8] sm:$0xff]
  %v33 = vld [vmem:[%s0] sm:$0xf]
  %v34 = vld [vmem:[%s0 + $0x4] sm:$0xf]
  %v35 = vld [vmem:[%s1] sm:$0xf]
  %v36 = vld [vmem:[%s1 + $0x4] sm:$0xf]
  %v37 = vld [vmem:[%s1 + $0x8] sm:$0xf]
  %v38 = vld [vmem:[%s1 + $0xc] sm:$0xf]
  %v39 = vld [vmem:[%s1 + $0x10] sm:$0xf]
  %v40 = vld [vmem:[%s1 + $0x14] sm:$0xf]
  %v41 = vld [vmem:[%s1 + $0x18] sm:$0xf]
  %v42 = vld [vmem:[%s1 + $0x1c] sm:$0xf]
  %v45 = vunpack.c.l.b16 %v33
  %v46 = vunpack.c.l.b16 %v34
  %v47 = vpack.c.b16 %v46, %v45
  %v56 = vunpack.c.l.b16 %v35
  %v57 = vunpack.c.l.b16 %v36
  %v58 = vunpack.c.l.b16 %v37
  %v59 = vunpack.c.l.b16 %v38
  %v60 = vunpack.c.l.b16 %v39
  %v61 = vunpack.c.l.b16 %v40
  %v62 = vunpack.c.l.b16 %v41
  %v63 = vunpack.c.l.b16 %v42
  %v64 = vpack.c.b16 %v57, %v56
  %v65 = vpack.c.b16 %v59, %v58
  %v66 = vpack.c.b16 %v61, %v60
  %v67 = vpack.c.b16 %v63, %v62
  %vm72 = vcmask 523264
  %v74 = vsel %vm72, %v47, 0
  %76 = vmatprep.subr.bf16.mxu0 0
  %77 = vmatpush1.bf16.msra.mxu0 0
  %78 = vmatprep.subr.bf16.mxu0 0
  %79 = vmatpush1.bf16.msra.mxu0 0
  %80 = vmatprep.subr.bf16.mxu0 0
  %81 = vmatpush1.bf16.msra.mxu0 0
  %82 = vmatprep.subr.bf16.mxu0 0
  %83 = vmatpush1.bf16.msra.mxu0 0
  %84 = vmatprep.subr.bf16.mxu0 0
  %85 = vmatpush1.bf16.msra.mxu0 %v67
  %86 = vmatprep.subr.bf16.mxu0 0
  %87 = vmatpush1.bf16.msra.mxu0 %v66
  %88 = vmatprep.subr.bf16.mxu0 0
  %89 = vmatpush1.bf16.msra.mxu0 %v65
  %90 = vmatprep.subr.bf16.mxu0 0
  %91 = vmatpush1.bf16.msra.mxu0 %v64
  %92 = vmatprep.subr.bf16.mxu0 0
  %93 = vmatpush2.bf16.msra.mxu0 0
  %94 = vmatprep.subr.bf16.mxu0 0
  %95 = vmatpush2.bf16.msra.mxu0 0
  %96 = vmatprep.subr.bf16.mxu0 0
  %97 = vmatpush2.bf16.msra.mxu0 0
  %98 = vmatprep.subr.bf16.mxu0 0
  %99 = vmatpush2.bf16.msra.mxu0 0
  %100 = vmatprep.subr.bf16.mxu0 0
  %101 = vmatpush2.bf16.msra.mxu0 0
  %102 = vmatprep.subr.bf16.mxu0 0
  %103 = vmatpush2.bf16.msra.mxu0 0
  %104 = vmatprep.subr.bf16.mxu0 0
  %105 = vmatpush2.bf16.msra.mxu0 0
  %106 = vmatprep.subr.bf16.mxu0 0
  %107 = vmatpush2.bf16.msra.mxu0 0
  %108 = vmatprep.mubr.bf16.mxu0 0
  %109 = vmatmul.mubr.bf16.gmra.mxu0 %v74
  %v110 = vpop.f32.mrf.mxu0
  %v111 = vadd.f32 0.0, %v110
  %v112 = vpop.f32.mrf.mxu0
  %v113 = vpop.f32.mrf.mxu0
  %v114 = vadd.f32 0.0, %v113
  %v115 = vpop.f32.mrf.mxu0
  %116 = vdwg.mxu0
  %v117 = vadd.f32 %v31, %v111
  %v118 = vadd.f32 %v32, %v114
  %vm119 = vcmask 261120
  %120 = vst.msk [vmem:[#allocation2] sm:$0xff] %vm119, %v117
  %121 = vst.msk [vmem:[#allocation2 + $0x8] sm:$0xff] %vm119, %v118
  // Predicated region
  $region30: #{bert_classifier_forward.17} parent=0 // pred_check
    %p122 = pneg %p24
  $region31: #{bert_classifier_forward.17} parent=0 // pred_check_branch
    %124 = sbr.rel (%p122) target = $region33
  $region32: #{bert_classifier_forward.17} parent=0 // pred_region
    %v125 = vld [vmem:[#allocation2] sm:$0xff]
    %v126 = vld [vmem:[#allocation2 + $0x8] sm:$0xff]
    %v127 = vld [vmem:[%s2] sm:$0x1]
    %v129 = vlaneseq
    %v130 = vshrl.u32 %v129, 7
    %v131 = vsub.s32 0, %v130
    %v132 = vrot.slane %v127, %v131
    %v134 = vadd.f32 %v125, %v132
    %v135 = vadd.f32 %v126, %v132
    %v136 = vld [vmem:[%s3] sm:$0xf]
    %v137 = vld [vmem:[%s3 + $0x4] sm:$0xf]
    %v138 = vunpack.c.l.bf16 %v136
    %v139 = vunpack.c.l.bf16 %v137
    %v140 = vadd.f32 %v134, %v138
    %v141 = vadd.f32 %v135, %v139
    %v142 = vsel %vm119, %v140, 0.0
    %143 = vadd.xlane.f32.xlu0 %v142
    %v144 = vpop.xlane.xlu0 %143
    %v145 = vsel %vm119, %v141, 0.0
    %146 = vadd.xlane.f32.xlu0 %v145
    %v147 = vpop.xlane.xlu0 %146
    %v148 = vrcp.pop 32.0
    %v149 = vmul.f32 %v144, %v148
    %v150 = vmul.f32 %v147, %v148
    %v151 = vsub.f32 %v140, %v149
    %v152 = vsub.f32 %v141, %v150
    %v153 = vmul.f32 %v151, %v151
    %v154 = vmul.f32 %v152, %v152
    %v155 = vsel %vm119, %v153, 0.0
    %156 = vadd.xlane.f32.xlu0 %v155
    %v157 = vpop.xlane.xlu0 %156
    %v158 = vsel %vm119, %v154, 0.0
    %159 = vadd.xlane.f32.xlu0 %v158
    %v160 = vpop.xlane.xlu0 %159
    %v161 = vmul.f32 %v157, %v148
    %v162 = vmul.f32 %v160, %v148
    %v163 = vadd.f32 %v161, 1e-12
    %v164 = vadd.f32 %v162, 1e-12
    %v165 = vrsqrt.pop %v163
    %v166 = vrsqrt.pop %v164
    %v167 = vmul.f32 %v151, %v165
    %v168 = vmul.f32 %v152, %v166
    %v169 = vld [vmem:[%s4] sm:$0x1]
    %v171 = vlaneseq
    %v172 = vshrl.u32 %v171, 7
    %v173 = vsub.s32 0, %v172
    %v174 = vrot.slane %v169, %v173
    %v176 = vmul.f32 %v167, %v174
    %v177 = vmul.f32 %v168, %v174
    %v178 = vld [vmem:[%s5] sm:$0x1]
    %v180 = vlaneseq
    %v181 = vshrl.u32 %v180, 7
    %v182 = vsub.s32 0, %v181
    %v183 = vrot.slane %v178, %v182
    %v185 = vadd.f32 %v176, %v183
    %v186 = vadd.f32 %v177, %v183
    %v187 = vpack.c.bf16 %v186, %v185
    %v189 = vunpack.c.l.b16 %v187
    %v190 = vunpack.c.h.b16 %v187
    %v191 = vpack.c.b16 %v189, %v189
    %v192 = vpack.c.b16 %v190, %v190
    %vm195 = vcmask 257024
    %196 = vst.msk [vmem:[%s6] sm:$0xf] %vm195, %v191
    %197 = vst.msk [vmem:[%s6 + $0x4] sm:$0xf] %vm195, %v192
  $region33: #{bert_classifier_forward.17} parent=0 // pred_fallthru
    _
  // Predicated region
  $region34: #{bert_classifier_forward.17} parent=0 // pred_check
    _
  $region35: #{bert_classifier_forward.17} parent=0 // pred_check_branch
    %199 = sbr.rel (0) target = $region37
  $region36: #{bert_classifier_forward.17} parent=0 // pred_region
    _
  $region37: #{bert_classifier_forward.17} parent=0 // pred_fallthru
    _
  // Predicated region
  $region38: #{bert_classifier_forward.17} parent=0 // pred_check
    _
  $region39: #{bert_classifier_forward.17} parent=0 // pred_check_branch
    %201 = sbr.rel (0) target = $region41
  $region40: #{bert_classifier_forward.17} parent=0 // pred_region
    _
  $region41: #{bert_classifier_forward.17} parent=0 // pred_fallthru
    _

</llo_original>
